<compile_context>
chip_gen: v6e
topology: v6e:2x2x1
jax: 0.10.0
libtpu: 0.0.40
codegen_flags: <defaults>
</compile_context>

<pallas_src>
import functools

import jax
import jax.numpy as jnp
from jax import lax
from jax.experimental import pallas as pl
from jax.experimental.pallas import tpu as pltpu

# ----------------------------- small synthetic config -----------------------------
HIDDEN = 128                              # lane-dense hidden size
NUM_HEADS = 4
NUM_KV_HEADS = 2
HEAD_DIM = HIDDEN // NUM_HEADS            # 32
Q_SIZE = NUM_HEADS * HEAD_DIM             # 128
KV_SIZE = NUM_KV_HEADS * HEAD_DIM         # 64
QKV_OUT = Q_SIZE + 2 * KV_SIZE            # 256
INTERMEDIATE = 256
NUM_LAYERS = 2
VOCAB = 256
RMS_EPS = 1e-6
ROPE_THETA = 10000.0
SEQ = 8


# ----------------------------------- kernel ---------------------------------------
def _qwen2_layers_kernel(h0_ref, cos_ref, sin_ref,
                         ln1_ref, wqkv_ref, bqkv_ref, wo_ref,
                         ln2_ref, wgu_ref, wd_ref, fnorm_ref,
                         out_ref,
                         h_state, res_state, *,
                         num_heads, num_kv_heads, head_dim, inter,
                         q_size, kv_size, eps, scale):
    """One grid step == one decoder layer. State carried in VMEM scratch."""
    layer = pl.program_id(0)

    # Layer 0: residual := hidden (modeled as residual = 0, then x = h + 0 = h).
    @pl.when(layer == 0)
    def _init():
        h_state[...] = h0_ref[...].astype(jnp.float32)
        res_state[...] = jnp.zeros_like(res_state)

    half = head_dim // 2
    cos = cos_ref[...]                       # [T, half] f32
    sin = sin_ref[...]

    def rms(x, w):                           # f32 statistics
        var = jnp.mean(x * x, axis=-1, keepdims=True)
        return x * lax.rsqrt(var + eps) * w

    def rope(x):                             # Neox rotate-half, f32
        x1 = x[:, :half]
        x2 = x[:, half:]
        return jnp.concatenate([x1 * cos - x2 * sin, x2 * cos + x1 * sin], axis=-1)

    # ---- input_layernorm with fused residual add -----------------------------
    x = h_state[...] + res_state[...]        # [T, H] f32
    res1 = x
    hn = rms(x, ln1_ref[...])

    # ---- qkv projection (bf16 MXU inputs, f32 accumulation) ------------------
    qkv = jnp.dot(hn.astype(jnp.bfloat16), wqkv_ref[...],
                  preferred_element_type=jnp.float32) + bqkv_ref[...]
    q = qkv[:, :q_size]
    k = qkv[:, q_size:q_size + kv_size]
    v = qkv[:, q_size + kv_size:]

    T = q.shape[0]
    qi = lax.broadcasted_iota(jnp.int32, (T, T), 0)
    ki = lax.broadcasted_iota(jnp.int32, (T, T), 1)
    causal = ki <= qi

    rep = num_heads // num_kv_heads
    # RoPE the KV heads once; no jnp.repeat GQA expansion.
    k_heads = []
    v_heads = []
    for g in range(num_kv_heads):
        kg = rope(k[:, g * head_dim:(g + 1) * head_dim]).astype(jnp.bfloat16)
        k_heads.append(kg)
        v_heads.append(v[:, g * head_dim:(g + 1) * head_dim].astype(jnp.bfloat16))

    contract = (((1,), (1,)), ((), ()))      # q @ k^T (contract head_dim)
    out_heads = []
    for h in range(num_heads):
        g = h // rep                         # GQA head mapping (k0,k0,k1,k1)
        qh = (rope(q[:, h * head_dim:(h + 1) * head_dim]) * scale).astype(jnp.bfloat16)
        s = lax.dot_general(qh, k_heads[g], contract,
                            preferred_element_type=jnp.float32)     # [T, T] f32
        s = jnp.where(causal, s, -1e30)
        m = jnp.max(s, axis=-1, keepdims=True)
        p = jnp.exp(s - m)
        inv_l = pl.reciprocal(jnp.sum(p, axis=-1, keepdims=True), approx=True)
        oh = jnp.dot(p.astype(jnp.bfloat16), v_heads[g],
                     preferred_element_type=jnp.float32)             # [T, D] f32
        out_heads.append(oh * inv_l)
    attn = jnp.concatenate(out_heads, axis=-1)                       # [T, q_size]

    # ---- o_proj + post_attention_layernorm -----------------------------------
    o = jnp.dot(attn.astype(jnp.bfloat16), wo_ref[...],
                preferred_element_type=jnp.float32)
    x2 = o + res1
    hn2 = rms(x2, ln2_ref[...])

    # ---- MLP: gate_up -> SiLU*mul -> down, fused ------------------------------
    gu = jnp.dot(hn2.astype(jnp.bfloat16), wgu_ref[...],
                 preferred_element_type=jnp.float32)
    gpart = gu[:, :inter]
    upart = gu[:, inter:]
    act = gpart * jax.nn.sigmoid(gpart) * upart
    mlp_out = jnp.dot(act.astype(jnp.bfloat16), wd_ref[...],
                      preferred_element_type=jnp.float32)

    # carry state to next layer
    h_state[...] = mlp_out
    res_state[...] = x2

    # final RMSNorm fused into the last grid step
    @pl.when(layer == pl.num_programs(0) - 1)
    def _finalize():
        xf = mlp_out + x2
        var = jnp.mean(xf * xf, axis=-1, keepdims=True)
        out_ref[...] = (xf * lax.rsqrt(var + eps) * fnorm_ref[...]).astype(out_ref.dtype)


# ---------------------------------- wrapper ----------------------------------------
def qwen2_forward(params, input_ids, positions):
    """Returns final hidden states [T, HIDDEN] (same as Qwen2ForCausalLM.forward)."""
    T = input_ids.shape[0]
    h0 = params["embed"][input_ids].astype(jnp.float32)      # embedding gather (glue)

    # RoPE cos/sin tables, shared by all layers.
    half = HEAD_DIM // 2
    inv_freq = 1.0 / (ROPE_THETA ** (jnp.arange(0, HEAD_DIM, 2, dtype=jnp.float32)
                                     / HEAD_DIM))
    ang = positions.astype(jnp.float32)[:, None] * inv_freq[None, :]   # [T, half]
    cos = jnp.cos(ang)
    sin = jnp.sin(ang)

    kernel = functools.partial(
        _qwen2_layers_kernel,
        num_heads=NUM_HEADS, num_kv_heads=NUM_KV_HEADS, head_dim=HEAD_DIM,
        inter=INTERMEDIATE, q_size=Q_SIZE, kv_size=KV_SIZE,
        eps=RMS_EPS, scale=HEAD_DIM ** -0.5)

    # rough per-model cost hint for the XLA scheduler
    per_layer_flops = 2 * T * (HIDDEN * QKV_OUT + Q_SIZE * HIDDEN
                               + HIDDEN * 2 * INTERMEDIATE + INTERMEDIATE * HIDDEN
                               + 2 * NUM_HEADS * T * HEAD_DIM)
    weight_bytes = 2 * NUM_LAYERS * (HIDDEN * QKV_OUT + Q_SIZE * HIDDEN
                                     + HIDDEN * 2 * INTERMEDIATE
                                     + INTERMEDIATE * HIDDEN)
    cost = pl.CostEstimate(flops=NUM_LAYERS * per_layer_flops,
                           transcendentals=NUM_LAYERS * (2 * T * INTERMEDIATE
                                                         + NUM_HEADS * T * T),
                           bytes_accessed=weight_bytes + 4 * 3 * T * HIDDEN)

    out = pl.pallas_call(
        kernel,
        out_shape=jax.ShapeDtypeStruct((T, HIDDEN), jnp.float32),
        grid=(NUM_LAYERS,),
        in_specs=[
            pl.BlockSpec((T, HIDDEN), lambda l: (0, 0)),                        # h0
            pl.BlockSpec((T, half), lambda l: (0, 0)),                          # cos
            pl.BlockSpec((T, half), lambda l: (0, 0)),                          # sin
            pl.BlockSpec((None, 1, HIDDEN), lambda l: (l, 0, 0)),               # ln1
            pl.BlockSpec((None, HIDDEN, QKV_OUT), lambda l: (l, 0, 0)),         # w_qkv
            pl.BlockSpec((None, 1, QKV_OUT), lambda l: (l, 0, 0)),              # b_qkv
            pl.BlockSpec((None, Q_SIZE, HIDDEN), lambda l: (l, 0, 0)),          # w_o
            pl.BlockSpec((None, 1, HIDDEN), lambda l: (l, 0, 0)),               # ln2
            pl.BlockSpec((None, HIDDEN, 2 * INTERMEDIATE), lambda l: (l, 0, 0)),  # w_gu
            pl.BlockSpec((None, INTERMEDIATE, HIDDEN), lambda l: (l, 0, 0)),    # w_down
            pl.BlockSpec((1, HIDDEN), lambda l: (0, 0)),                        # final norm
        ],
        out_specs=pl.BlockSpec((T, HIDDEN), lambda l: (0, 0)),
        scratch_shapes=[pltpu.VMEM((T, HIDDEN), jnp.float32),    # hidden carry
                        pltpu.VMEM((T, HIDDEN), jnp.float32)],   # residual carry
        compiler_params=pltpu.CompilerParams(
            dimension_semantics=("arbitrary",),                  # layers are sequential
            vmem_limit_bytes=32 * 1024 * 1024),
        cost_estimate=cost,
    )(h0, cos, sin,
      params["ln1"], params["w_qkv"], params["b_qkv"], params["w_o"],
      params["ln2"], params["w_gate_up"], params["w_down"], params["final_norm"])
    return out


# ----------------------------------- params ----------------------------------------
def init_params(key):
    def normal(k, shape, dtype, scale=0.02):
        return (scale * jax.random.normal(k, shape, dtype=jnp.float32)).astype(dtype)

    ks = jax.random.split(key, 6)
    params = {
        "embed": normal(ks[0], (VOCAB, HIDDEN), jnp.float32),
        "ln1": jnp.ones((NUM_LAYERS, 1, HIDDEN), jnp.float32),
        "ln2": jnp.ones((NUM_LAYERS, 1, HIDDEN), jnp.float32),
        "final_norm": jnp.ones((1, HIDDEN), jnp.float32),
        # matmul weights stored bf16 (MXU inputs), biases/norms in f32
        "w_qkv": normal(ks[1], (NUM_LAYERS, HIDDEN, QKV_OUT), jnp.bfloat16),
        "b_qkv": normal(ks[2], (NUM_LAYERS, 1, QKV_OUT), jnp.float32),
        "w_o": normal(ks[3], (NUM_LAYERS, Q_SIZE, HIDDEN), jnp.bfloat16),
        "w_gate_up": normal(ks[4], (NUM_LAYERS, HIDDEN, 2 * INTERMEDIATE), jnp.bfloat16),
        "w_down": normal(ks[5], (NUM_LAYERS, INTERMEDIATE, HIDDEN), jnp.bfloat16),
    }
    return params


# ------------------------------------ main -----------------------------------------
if __name__ == "__main__":
    key = jax.random.PRNGKey(0)
    pkey, ikey = jax.random.split(key)
    params = init_params(pkey)
    input_ids = jax.random.randint(ikey, (SEQ,), 0, VOCAB, dtype=jnp.int32)
    positions = jnp.arange(SEQ, dtype=jnp.int32)

    hidden = qwen2_forward(params, input_ids, positions)
    hidden = jax.block_until_ready(hidden)
    assert hidden.shape == (SEQ, HIDDEN)
    assert bool(jnp.all(jnp.isfinite(hidden)))
    print("KERNEL_OK")
</pallas_src>

<mosaic_0001>
module attributes {stable_mosaic.version = 11 : i64} {
  func.func @_qwen2_layers_kernel(%arg0: i32, %arg1: memref<8x128xf32, #tpu.memory_space<vmem>>, %arg2: memref<8x16xf32, #tpu.memory_space<vmem>>, %arg3: memref<8x16xf32, #tpu.memory_space<vmem>>, %arg4: memref<1x1x128xf32, #tpu.memory_space<vmem>>, %arg5: memref<1x128x256xbf16, #tpu.memory_space<vmem>>, %arg6: memref<1x1x256xf32, #tpu.memory_space<vmem>>, %arg7: memref<1x128x128xbf16, #tpu.memory_space<vmem>>, %arg8: memref<1x1x128xf32, #tpu.memory_space<vmem>>, %arg9: memref<1x128x512xbf16, #tpu.memory_space<vmem>>, %arg10: memref<1x256x128xbf16, #tpu.memory_space<vmem>>, %arg11: memref<1x128xf32, #tpu.memory_space<vmem>>, %arg12: memref<8x128xf32, #tpu.memory_space<vmem>>, %arg13: memref<8x128xf32, #tpu.memory_space<vmem>>, %arg14: memref<8x128xf32, #tpu.memory_space<vmem>>) attributes {dimension_semantics = [#tpu.dimension_semantics<arbitrary>], iteration_bounds = array<i64: 2>, scalar_prefetch = 0 : i64, scratch_operands = 2 : i64, tpu.core_type = #tpu.core_type<tc>, window_params = [{pipeline_mode = #tpu.pipeline_mode<synchronous>, transform_indices = @transform_0, window_bounds = array<i64: 8, 128>}, {pipeline_mode = #tpu.pipeline_mode<synchronous>, transform_indices = @transform_1, window_bounds = array<i64: 8, 16>}, {pipeline_mode = #tpu.pipeline_mode<synchronous>, transform_indices = @transform_2, window_bounds = array<i64: 8, 16>}, {transform_indices = @transform_3, window_bounds = array<i64: 1, 1, 128>}, {transform_indices = @transform_4, window_bounds = array<i64: 1, 128, 256>}, {transform_indices = @transform_5, window_bounds = array<i64: 1, 1, 256>}, {transform_indices = @transform_6, window_bounds = array<i64: 1, 128, 128>}, {transform_indices = @transform_7, window_bounds = array<i64: 1, 1, 128>}, {transform_indices = @transform_8, window_bounds = array<i64: 1, 128, 512>}, {transform_indices = @transform_9, window_bounds = array<i64: 1, 256, 128>}, {pipeline_mode = #tpu.pipeline_mode<synchronous>, transform_indices = @transform_10, window_bounds = array<i64: 1, 128>}, {pipeline_mode = #tpu.pipeline_mode<synchronous>, transform_indices = @transform_11, window_bounds = array<i64: 8, 128>}]} {
    %c0_i32 = arith.constant 0 : i32
    %0 = arith.cmpi eq, %arg0, %c0_i32 : i32
    %1 = arith.extui %0 : i1 to i32
    %c0_i32_0 = arith.constant 0 : i32
    %2 = arith.cmpi ne, %1, %c0_i32_0 : i32
    scf.if %2 {
      %c0_68 = arith.constant 0 : index
      %c0_69 = arith.constant 0 : index
      %216 = vector.load %arg1[%c0_68, %c0_69] : memref<8x128xf32, #tpu.memory_space<vmem>>, vector<8x128xf32>
      %c0_70 = arith.constant 0 : index
      %c0_71 = arith.constant 0 : index
      %217 = vector.load %arg13[%c0_70, %c0_71] : memref<8x128xf32, #tpu.memory_space<vmem>>, vector<8x128xf32>
      tpu.vector_store %arg13[%c0_70, %c0_71], %216 {strides = array<i32>} : memref<8x128xf32, #tpu.memory_space<vmem>>, vector<8x128xf32>,
      %cst_72 = arith.constant 0.000000e+00 : f32
      %218 = vector.broadcast %cst_72 : f32 to vector<8x128xf32>
      %c0_73 = arith.constant 0 : index
      %c0_74 = arith.constant 0 : index
      %219 = vector.load %arg14[%c0_73, %c0_74] : memref<8x128xf32, #tpu.memory_space<vmem>>, vector<8x128xf32>
      tpu.vector_store %arg14[%c0_73, %c0_74], %218 {strides = array<i32>} : memref<8x128xf32, #tpu.memory_space<vmem>>, vector<8x128xf32>,
    } else {
    }
    %c0 = arith.constant 0 : index
    %c0_1 = arith.constant 0 : index
    %3 = vector.load %arg2[%c0, %c0_1] : memref<8x16xf32, #tpu.memory_space<vmem>>, vector<8x16xf32>
    %c0_2 = arith.constant 0 : index
    %c0_3 = arith.constant 0 : index
    %4 = vector.load %arg3[%c0_2, %c0_3] : memref<8x16xf32, #tpu.memory_space<vmem>>, vector<8x16xf32>
    %c0_4 = arith.constant 0 : index
    %c0_5 = arith.constant 0 : index
    %5 = vector.load %arg13[%c0_4, %c0_5] : memref<8x128xf32, #tpu.memory_space<vmem>>, vector<8x128xf32>
    %c0_6 = arith.constant 0 : index
    %c0_7 = arith.constant 0 : index
    %6 = vector.load %arg14[%c0_6, %c0_7] : memref<8x128xf32, #tpu.memory_space<vmem>>, vector<8x128xf32>
    %7 = arith.addf %5, %6 : vector<8x128xf32>
    %c0_8 = arith.constant 0 : index
    %c0_9 = arith.constant 0 : index
    %c0_10 = arith.constant 0 : index
    %8 = vector.load %arg4[%c0_8, %c0_9, %c0_10] : memref<1x1x128xf32, #tpu.memory_space<vmem>>, vector<1x1x128xf32>
    %9 = vector.shape_cast %8 : vector<1x1x128xf32> to vector<1x128xf32>
    %10 = arith.mulf %7, %7 : vector<8x128xf32>
    %cst = arith.constant dense<0.000000e+00> : vector<8xf32>
    %11 = vector.multi_reduction <add>, %10, %cst [1] : vector<8x128xf32> to vector<8xf32>
    %12 = vector.shape_cast %11 : vector<8xf32> to vector<8x1xf32>
    %cst_11 = arith.constant 1.280000e+02 : f32
    %13 = vector.broadcast %cst_11 : f32 to vector<8x1xf32>
    %14 = arith.divf %12, %13 : vector<8x1xf32>
    %cst_12 = arith.constant 9.99999997E-7 : f32
    %15 = vector.broadcast %cst_12 : f32 to vector<8x1xf32>
    %16 = arith.addf %14, %15 : vector<8x1xf32>
    %17 = math.rsqrt %16 : vector<8x1xf32>
    %18 = vector.broadcast %17 : vector<8x1xf32> to vector<8x128xf32>
    %19 = arith.mulf %7, %18 : vector<8x128xf32>
    %20 = vector.broadcast %9 : vector<1x128xf32> to vector<8x128xf32>
    %21 = arith.mulf %19, %20 : vector<8x128xf32>
    %22 = arith.truncf %21 : vector<8x128xf32> to vector<8x128xbf16>
    %c0_13 = arith.constant 0 : index
    %c0_14 = arith.constant 0 : index
    %c0_15 = arith.constant 0 : index
    %23 = vector.load %arg5[%c0_13, %c0_14, %c0_15] : memref<1x128x256xbf16, #tpu.memory_space<vmem>>, vector<1x128x256xbf16>
    %24 = vector.shape_cast %23 : vector<1x128x256xbf16> to vector<128x256xbf16>
    %cst_16 = arith.constant dense<0.000000e+00> : vector<8x256xf32>
    %25 = tpu.matmul %22, %24, %cst_16 {dimension_numbers = #tpu.dot_dimension_numbers<[1], [0], [0], [1], [0, 0, 1, 1], [], []>} : vector<8x128xbf16>, vector<128x256xbf16>, vector<8x256xf32> -> vector<8x256xf32>
    %c0_17 = arith.constant 0 : index
    %c0_18 = arith.constant 0 : index
    %c0_19 = arith.constant 0 : index
    %26 = vector.load %arg6[%c0_17, %c0_18, %c0_19] : memref<1x1x256xf32, #tpu.memory_space<vmem>>, vector<1x1x256xf32>
    %27 = vector.shape_cast %26 : vector<1x1x256xf32> to vector<1x256xf32>
    %28 = vector.broadcast %27 : vector<1x256xf32> to vector<8x256xf32>
    %29 = arith.addf %25, %28 : vector<8x256xf32>
    %30 = vector.extract_strided_slice %29 {offsets = [0, 0], sizes = [8, 128], strides = [1, 1]} : vector<8x256xf32> to vector<8x128xf32>
    %31 = vector.extract_strided_slice %29 {offsets = [0, 128], sizes = [8, 64], strides = [1, 1]} : vector<8x256xf32> to vector<8x64xf32>
    %32 = vector.extract_strided_slice %29 {offsets = [0, 192], sizes = [8, 64], strides = [1, 1]} : vector<8x256xf32> to vector<8x64xf32>
    %33 = tpu.iota {dimensions = array<i32: 0>} : vector<8x8xi32>
    %34 = tpu.iota {dimensions = array<i32: 1>} : vector<8x8xi32>
    %35 = arith.cmpi sle, %34, %33 : vector<8x8xi32>
    %36 = vector.extract_strided_slice %31 {offsets = [0, 0], sizes = [8, 32], strides = [1, 1]} : vector<8x64xf32> to vector<8x32xf32>
    %37 = vector.extract_strided_slice %36 {offsets = [0, 0], sizes = [8, 16], strides = [1, 1]} : vector<8x32xf32> to vector<8x16xf32>
    %38 = vector.extract_strided_slice %36 {offsets = [0, 16], sizes = [8, 16], strides = [1, 1]} : vector<8x32xf32> to vector<8x16xf32>
    %39 = arith.mulf %37, %3 : vector<8x16xf32>
    %40 = arith.mulf %38, %4 : vector<8x16xf32>
    %41 = arith.subf %39, %40 : vector<8x16xf32>
    %42 = arith.mulf %38, %3 : vector<8x16xf32>
    %43 = arith.mulf %37, %4 : vector<8x16xf32>
    %44 = arith.addf %42, %43 : vector<8x16xf32>
    %45 = tpu.concatenate %41, %44 in 1 : vector<8x16xf32>, vector<8x16xf32> -> vector<8x32xf32>
    %46 = arith.truncf %45 : vector<8x32xf32> to vector<8x32xbf16>
    %47 = vector.extract_strided_slice %32 {offsets = [0, 0], sizes = [8, 32], strides = [1, 1]} : vector<8x64xf32> to vector<8x32xf32>
    %48 = arith.truncf %47 : vector<8x32xf32> to vector<8x32xbf16>
    %49 = vector.extract_strided_slice %31 {offsets = [0, 32], sizes = [8, 32], strides = [1, 1]} : vector<8x64xf32> to vector<8x32xf32>
    %50 = vector.extract_strided_slice %49 {offsets = [0, 0], sizes = [8, 16], strides = [1, 1]} : vector<8x32xf32> to vector<8x16xf32>
    %51 = vector.extract_strided_slice %49 {offsets = [0, 16], sizes = [8, 16], strides = [1, 1]} : vector<8x32xf32> to vector<8x16xf32>
    %52 = arith.mulf %50, %3 : vector<8x16xf32>
    %53 = arith.mulf %51, %4 : vector<8x16xf32>
    %54 = arith.subf %52, %53 : vector<8x16xf32>
    %55 = arith.mulf %51, %3 : vector<8x16xf32>
    %56 = arith.mulf %50, %4 : vector<8x16xf32>
    %57 = arith.addf %55, %56 : vector<8x16xf32>
    %58 = tpu.concatenate %54, %57 in 1 : vector<8x16xf32>, vector<8x16xf32> -> vector<8x32xf32>
    %59 = arith.truncf %58 : vector<8x32xf32> to vector<8x32xbf16>
    %60 = vector.extract_strided_slice %32 {offsets = [0, 32], sizes = [8, 32], strides = [1, 1]} : vector<8x64xf32> to vector<8x32xf32>
    %61 = arith.truncf %60 : vector<8x32xf32> to vector<8x32xbf16>
    %62 = vector.extract_strided_slice %30 {offsets = [0, 0], sizes = [8, 32], strides = [1, 1]} : vector<8x128xf32> to vector<8x32xf32>
    %63 = vector.extract_strided_slice %62 {offsets = [0, 0], sizes = [8, 16], strides = [1, 1]} : vector<8x32xf32> to vector<8x16xf32>
    %64 = vector.extract_strided_slice %62 {offsets = [0, 16], sizes = [8, 16], strides = [1, 1]} : vector<8x32xf32> to vector<8x16xf32>
    %65 = arith.mulf %63, %3 : vector<8x16xf32>
    %66 = arith.mulf %64, %4 : vector<8x16xf32>
    %67 = arith.subf %65, %66 : vector<8x16xf32>
    %68 = arith.mulf %64, %3 : vector<8x16xf32>
    %69 = arith.mulf %63, %4 : vector<8x16xf32>
    %70 = arith.addf %68, %69 : vector<8x16xf32>
    %71 = tpu.concatenate %67, %70 in 1 : vector<8x16xf32>, vector<8x16xf32> -> vector<8x32xf32>
    %cst_20 = arith.constant 0.176776692 : f32
    %72 = vector.broadcast %cst_20 : f32 to vector<8x32xf32>
    %73 = arith.mulf %71, %72 : vector<8x32xf32>
    %74 = arith.truncf %73 : vector<8x32xf32> to vector<8x32xbf16>
    %cst_21 = arith.constant dense<0.000000e+00> : vector<8x8xf32>
    %75 = tpu.matmul %74, %46, %cst_21 {dimension_numbers = #tpu.dot_dimension_numbers<[1], [1], [0], [0], [0, 0, 1, 0], [], []>} : vector<8x32xbf16>, vector<8x32xbf16>, vector<8x8xf32> -> vector<8x8xf32>
    %cst_22 = arith.constant -1.000000e+30 : f32
    %76 = vector.broadcast %cst_22 : f32 to vector<8x8xf32>
    %77 = arith.select %35, %75, %76 : vector<8x8xi1>, vector<8x8xf32>
    %cst_23 = arith.constant dense<0xFF800000> : vector<8xf32>
    %78 = vector.multi_reduction <maximumf>, %77, %cst_23 [1] : vector<8x8xf32> to vector<8xf32>
    %79 = vector.shape_cast %78 : vector<8xf32> to vector<8x1xf32>
    %80 = vector.broadcast %79 : vector<8x1xf32> to vector<8x8xf32>
    %81 = arith.subf %77, %80 : vector<8x8xf32>
    %82 = math.exp %81 : vector<8x8xf32>
    %cst_24 = arith.constant dense<0.000000e+00> : vector<8xf32>
    %83 = vector.multi_reduction <add>, %82, %cst_24 [1] : vector<8x8xf32> to vector<8xf32>
    %84 = vector.shape_cast %83 : vector<8xf32> to vector<8x1xf32>
    %85 = tpu.reciprocal %84 {approx = true} : vector<8x1xf32> -> vector<8x1xf32>
    %86 = arith.truncf %82 : vector<8x8xf32> to vector<8x8xbf16>
    %cst_25 = arith.constant dense<0.000000e+00> : vector<8x32xf32>
    %87 = tpu.matmul %86, %48, %cst_25 {dimension_numbers = #tpu.dot_dimension_numbers<[1], [0], [0], [1], [0, 0, 1, 1], [], []>} : vector<8x8xbf16>, vector<8x32xbf16>, vector<8x32xf32> -> vector<8x32xf32>
    %88 = vector.broadcast %85 : vector<8x1xf32> to vector<8x32xf32>
    %89 = arith.mulf %87, %88 : vector<8x32xf32>
    %90 = vector.extract_strided_slice %30 {offsets = [0, 32], sizes = [8, 32], strides = [1, 1]} : vector<8x128xf32> to vector<8x32xf32>
    %91 = vector.extract_strided_slice %90 {offsets = [0, 0], sizes = [8, 16], strides = [1, 1]} : vector<8x32xf32> to vector<8x16xf32>
    %92 = vector.extract_strided_slice %90 {offsets = [0, 16], sizes = [8, 16], strides = [1, 1]} : vector<8x32xf32> to vector<8x16xf32>
    %93 = arith.mulf %91, %3 : vector<8x16xf32>
    %94 = arith.mulf %92, %4 : vector<8x16xf32>
    %95 = arith.subf %93, %94 : vector<8x16xf32>
    %96 = arith.mulf %92, %3 : vector<8x16xf32>
    %97 = arith.mulf %91, %4 : vector<8x16xf32>
    %98 = arith.addf %96, %97 : vector<8x16xf32>
    %99 = tpu.concatenate %95, %98 in 1 : vector<8x16xf32>, vector<8x16xf32> -> vector<8x32xf32>
    %cst_26 = arith.constant 0.176776692 : f32
    %100 = vector.broadcast %cst_26 : f32 to vector<8x32xf32>
    %101 = arith.mulf %99, %100 : vector<8x32xf32>
    %102 = arith.truncf %101 : vector<8x32xf32> to vector<8x32xbf16>
    %cst_27 = arith.constant dense<0.000000e+00> : vector<8x8xf32>
    %103 = tpu.matmul %102, %46, %cst_27 {dimension_numbers = #tpu.dot_dimension_numbers<[1], [1], [0], [0], [0, 0, 1, 0], [], []>} : vector<8x32xbf16>, vector<8x32xbf16>, vector<8x8xf32> -> vector<8x8xf32>
    %cst_28 = arith.constant -1.000000e+30 : f32
    %104 = vector.broadcast %cst_28 : f32 to vector<8x8xf32>
    %105 = arith.select %35, %103, %104 : vector<8x8xi1>, vector<8x8xf32>
    %cst_29 = arith.constant dense<0xFF800000> : vector<8xf32>
    %106 = vector.multi_reduction <maximumf>, %105, %cst_29 [1] : vector<8x8xf32> to vector<8xf32>
    %107 = vector.shape_cast %106 : vector<8xf32> to vector<8x1xf32>
    %108 = vector.broadcast %107 : vector<8x1xf32> to vector<8x8xf32>
    %109 = arith.subf %105, %108 : vector<8x8xf32>
    %110 = math.exp %109 : vector<8x8xf32>
    %cst_30 = arith.constant dense<0.000000e+00> : vector<8xf32>
    %111 = vector.multi_reduction <add>, %110, %cst_30 [1] : vector<8x8xf32> to vector<8xf32>
    %112 = vector.shape_cast %111 : vector<8xf32> to vector<8x1xf32>
    %113 = tpu.reciprocal %112 {approx = true} : vector<8x1xf32> -> vector<8x1xf32>
    %114 = arith.truncf %110 : vector<8x8xf32> to vector<8x8xbf16>
    %cst_31 = arith.constant dense<0.000000e+00> : vector<8x32xf32>
    %115 = tpu.matmul %114, %48, %cst_31 {dimension_numbers = #tpu.dot_dimension_numbers<[1], [0], [0], [1], [0, 0, 1, 1], [], []>} : vector<8x8xbf16>, vector<8x32xbf16>, vector<8x32xf32> -> vector<8x32xf32>
    %116 = vector.broadcast %113 : vector<8x1xf32> to vector<8x32xf32>
    %117 = arith.mulf %115, %116 : vector<8x32xf32>
    %118 = vector.extract_strided_slice %30 {offsets = [0, 64], sizes = [8, 32], strides = [1, 1]} : vector<8x128xf32> to vector<8x32xf32>
    %119 = vector.extract_strided_slice %118 {offsets = [0, 0], sizes = [8, 16], strides = [1, 1]} : vector<8x32xf32> to vector<8x16xf32>
    %120 = vector.extract_strided_slice %118 {offsets = [0, 16], sizes = [8, 16], strides = [1, 1]} : vector<8x32xf32> to vector<8x16xf32>
    %121 = arith.mulf %119, %3 : vector<8x16xf32>
    %122 = arith.mulf %120, %4 : vector<8x16xf32>
    %123 = arith.subf %121, %122 : vector<8x16xf32>
    %124 = arith.mulf %120, %3 : vector<8x16xf32>
    %125 = arith.mulf %119, %4 : vector<8x16xf32>
    %126 = arith.addf %124, %125 : vector<8x16xf32>
    %127 = tpu.concatenate %123, %126 in 1 : vector<8x16xf32>, vector<8x16xf32> -> vector<8x32xf32>
    %cst_32 = arith.constant 0.176776692 : f32
    %128 = vector.broadcast %cst_32 : f32 to vector<8x32xf32>
    %129 = arith.mulf %127, %128 : vector<8x32xf32>
    %130 = arith.truncf %129 : vector<8x32xf32> to vector<8x32xbf16>
    %cst_33 = arith.constant dense<0.000000e+00> : vector<8x8xf32>
    %131 = tpu.matmul %130, %59, %cst_33 {dimension_numbers = #tpu.dot_dimension_numbers<[1], [1], [0], [0], [0, 0, 1, 0], [], []>} : vector<8x32xbf16>, vector<8x32xbf16>, vector<8x8xf32> -> vector<8x8xf32>
    %cst_34 = arith.constant -1.000000e+30 : f32
    %132 = vector.broadcast %cst_34 : f32 to vector<8x8xf32>
    %133 = arith.select %35, %131, %132 : vector<8x8xi1>, vector<8x8xf32>
    %cst_35 = arith.constant dense<0xFF800000> : vector<8xf32>
    %134 = vector.multi_reduction <maximumf>, %133, %cst_35 [1] : vector<8x8xf32> to vector<8xf32>
    %135 = vector.shape_cast %134 : vector<8xf32> to vector<8x1xf32>
    %136 = vector.broadcast %135 : vector<8x1xf32> to vector<8x8xf32>
    %137 = arith.subf %133, %136 : vector<8x8xf32>
    %138 = math.exp %137 : vector<8x8xf32>
    %cst_36 = arith.constant dense<0.000000e+00> : vector<8xf32>
    %139 = vector.multi_reduction <add>, %138, %cst_36 [1] : vector<8x8xf32> to vector<8xf32>
    %140 = vector.shape_cast %139 : vector<8xf32> to vector<8x1xf32>
    %141 = tpu.reciprocal %140 {approx = true} : vector<8x1xf32> -> vector<8x1xf32>
    %142 = arith.truncf %138 : vector<8x8xf32> to vector<8x8xbf16>
    %cst_37 = arith.constant dense<0.000000e+00> : vector<8x32xf32>
    %143 = tpu.matmul %142, %61, %cst_37 {dimension_numbers = #tpu.dot_dimension_numbers<[1], [0], [0], [1], [0, 0, 1, 1], [], []>} : vector<8x8xbf16>, vector<8x32xbf16>, vector<8x32xf32> -> vector<8x32xf32>
    %144 = vector.broadcast %141 : vector<8x1xf32> to vector<8x32xf32>
    %145 = arith.mulf %143, %144 : vector<8x32xf32>
    %146 = vector.extract_strided_slice %30 {offsets = [0, 96], sizes = [8, 32], strides = [1, 1]} : vector<8x128xf32> to vector<8x32xf32>
    %147 = vector.extract_strided_slice %146 {offsets = [0, 0], sizes = [8, 16], strides = [1, 1]} : vector<8x32xf32> to vector<8x16xf32>
    %148 = vector.extract_strided_slice %146 {offsets = [0, 16], sizes = [8, 16], strides = [1, 1]} : vector<8x32xf32> to vector<8x16xf32>
    %149 = arith.mulf %147, %3 : vector<8x16xf32>
    %150 = arith.mulf %148, %4 : vector<8x16xf32>
    %151 = arith.subf %149, %150 : vector<8x16xf32>
    %152 = arith.mulf %148, %3 : vector<8x16xf32>
    %153 = arith.mulf %147, %4 : vector<8x16xf32>
    %154 = arith.addf %152, %153 : vector<8x16xf32>
    %155 = tpu.concatenate %151, %154 in 1 : vector<8x16xf32>, vector<8x16xf32> -> vector<8x32xf32>
    %cst_38 = arith.constant 0.176776692 : f32
    %156 = vector.broadcast %cst_38 : f32 to vector<8x32xf32>
    %157 = arith.mulf %155, %156 : vector<8x32xf32>
    %158 = arith.truncf %157 : vector<8x32xf32> to vector<8x32xbf16>
    %cst_39 = arith.constant dense<0.000000e+00> : vector<8x8xf32>
    %159 = tpu.matmul %158, %59, %cst_39 {dimension_numbers = #tpu.dot_dimension_numbers<[1], [1], [0], [0], [0, 0, 1, 0], [], []>} : vector<8x32xbf16>, vector<8x32xbf16>, vector<8x8xf32> -> vector<8x8xf32>
    %cst_40 = arith.constant -1.000000e+30 : f32
    %160 = vector.broadcast %cst_40 : f32 to vector<8x8xf32>
    %161 = arith.select %35, %159, %160 : vector<8x8xi1>, vector<8x8xf32>
    %cst_41 = arith.constant dense<0xFF800000> : vector<8xf32>
    %162 = vector.multi_reduction <maximumf>, %161, %cst_41 [1] : vector<8x8xf32> to vector<8xf32>
    %163 = vector.shape_cast %162 : vector<8xf32> to vector<8x1xf32>
    %164 = vector.broadcast %163 : vector<8x1xf32> to vector<8x8xf32>
    %165 = arith.subf %161, %164 : vector<8x8xf32>
    %166 = math.exp %165 : vector<8x8xf32>
    %cst_42 = arith.constant dense<0.000000e+00> : vector<8xf32>
    %167 = vector.multi_reduction <add>, %166, %cst_42 [1] : vector<8x8xf32> to vector<8xf32>
    %168 = vector.shape_cast %167 : vector<8xf32> to vector<8x1xf32>
    %169 = tpu.reciprocal %168 {approx = true} : vector<8x1xf32> -> vector<8x1xf32>
    %170 = arith.truncf %166 : vector<8x8xf32> to vector<8x8xbf16>
    %cst_43 = arith.constant dense<0.000000e+00> : vector<8x32xf32>
    %171 = tpu.matmul %170, %61, %cst_43 {dimension_numbers = #tpu.dot_dimension_numbers<[1], [0], [0], [1], [0, 0, 1, 1], [], []>} : vector<8x8xbf16>, vector<8x32xbf16>, vector<8x32xf32> -> vector<8x32xf32>
    %172 = vector.broadcast %169 : vector<8x1xf32> to vector<8x32xf32>
    %173 = arith.mulf %171, %172 : vector<8x32xf32>
    %174 = tpu.concatenate %89, %117, %145, %173 in 1 : vector<8x32xf32>, vector<8x32xf32>, vector<8x32xf32>, vector<8x32xf32> -> vector<8x128xf32>
    %175 = arith.truncf %174 : vector<8x128xf32> to vector<8x128xbf16>
    %c0_44 = arith.constant 0 : index
    %c0_45 = arith.constant 0 : index
    %c0_46 = arith.constant 0 : index
    %176 = vector.load %arg7[%c0_44, %c0_45, %c0_46] : memref<1x128x128xbf16, #tpu.memory_space<vmem>>, vector<1x128x128xbf16>
    %177 = vector.shape_cast %176 : vector<1x128x128xbf16> to vector<128x128xbf16>
    %cst_47 = arith.constant dense<0.000000e+00> : vector<8x128xf32>
    %178 = tpu.matmul %175, %177, %cst_47 {dimension_numbers = #tpu.dot_dimension_numbers<[1], [0], [0], [1], [0, 0, 1, 1], [], []>} : vector<8x128xbf16>, vector<128x128xbf16>, vector<8x128xf32> -> vector<8x128xf32>
    %179 = arith.addf %178, %7 : vector<8x128xf32>
    %c0_48 = arith.constant 0 : index
    %c0_49 = arith.constant 0 : index
    %c0_50 = arith.constant 0 : index
    %180 = vector.load %arg8[%c0_48, %c0_49, %c0_50] : memref<1x1x128xf32, #tpu.memory_space<vmem>>, vector<1x1x128xf32>
    %181 = vector.shape_cast %180 : vector<1x1x128xf32> to vector<1x128xf32>
    %182 = arith.mulf %179, %179 : vector<8x128xf32>
    %cst_51 = arith.constant dense<0.000000e+00> : vector<8xf32>
    %183 = vector.multi_reduction <add>, %182, %cst_51 [1] : vector<8x128xf32> to vector<8xf32>
    %184 = vector.shape_cast %183 : vector<8xf32> to vector<8x1xf32>
    %cst_52 = arith.constant 1.280000e+02 : f32
    %185 = vector.broadcast %cst_52 : f32 to vector<8x1xf32>
    %186 = arith.divf %184, %185 : vector<8x1xf32>
    %cst_53 = arith.constant 9.99999997E-7 : f32
    %187 = vector.broadcast %cst_53 : f32 to vector<8x1xf32>
    %188 = arith.addf %186, %187 : vector<8x1xf32>
    %189 = math.rsqrt %188 : vector<8x1xf32>
    %190 = vector.broadcast %189 : vector<8x1xf32> to vector<8x128xf32>
    %191 = arith.mulf %179, %190 : vector<8x128xf32>
    %192 = vector.broadcast %181 : vector<1x128xf32> to vector<8x128xf32>
    %193 = arith.mulf %191, %192 : vector<8x128xf32>
    %194 = arith.truncf %193 : vector<8x128xf32> to vector<8x128xbf16>
    %c0_54 = arith.constant 0 : index
    %c0_55 = arith.constant 0 : index
    %c0_56 = arith.constant 0 : index
    %195 = vector.load %arg9[%c0_54, %c0_55, %c0_56] : memref<1x128x512xbf16, #tpu.memory_space<vmem>>, vector<1x128x512xbf16>
    %196 = vector.shape_cast %195 : vector<1x128x512xbf16> to vector<128x512xbf16>
    %cst_57 = arith.constant dense<0.000000e+00> : vector<8x512xf32>
    %197 = tpu.matmul %194, %196, %cst_57 {dimension_numbers = #tpu.dot_dimension_numbers<[1], [0], [0], [1], [0, 0, 1, 1], [], []>} : vector<8x128xbf16>, vector<128x512xbf16>, vector<8x512xf32> -> vector<8x512xf32>
    %198 = vector.extract_strided_slice %197 {offsets = [0, 0], sizes = [8, 256], strides = [1, 1]} : vector<8x512xf32> to vector<8x256xf32>
    %199 = vector.extract_strided_slice %197 {offsets = [0, 256], sizes = [8, 256], strides = [1, 1]} : vector<8x512xf32> to vector<8x256xf32>
    %200 = arith.negf %198 : vector<8x256xf32>
    %201 = math.exp %200 : vector<8x256xf32>
    %cst_58 = arith.constant 1.000000e+00 : f32
    %202 = vector.broadcast %cst_58 : f32 to vector<8x256xf32>
    %203 = arith.addf %202, %201 : vector<8x256xf32>
    %204 = arith.divf %202, %203 : vector<8x256xf32>
    %205 = arith.mulf %198, %204 : vector<8x256xf32>
    %206 = arith.mulf %205, %199 : vector<8x256xf32>
    %207 = arith.truncf %206 : vector<8x256xf32> to vector<8x256xbf16>
    %c0_59 = arith.constant 0 : index
    %c0_60 = arith.constant 0 : index
    %c0_61 = arith.constant 0 : index
    %208 = vector.load %arg10[%c0_59, %c0_60, %c0_61] : memref<1x256x128xbf16, #tpu.memory_space<vmem>>, vector<1x256x128xbf16>
    %209 = vector.shape_cast %208 : vector<1x256x128xbf16> to vector<256x128xbf16>
    %cst_62 = arith.constant dense<0.000000e+00> : vector<8x128xf32>
    %210 = tpu.matmul %207, %209, %cst_62 {dimension_numbers = #tpu.dot_dimension_numbers<[1], [0], [0], [1], [0, 0, 1, 1], [], []>} : vector<8x256xbf16>, vector<256x128xbf16>, vector<8x128xf32> -> vector<8x128xf32>
    %c0_63 = arith.constant 0 : index
    %c0_64 = arith.constant 0 : index
    %211 = vector.load %arg13[%c0_63, %c0_64] : memref<8x128xf32, #tpu.memory_space<vmem>>, vector<8x128xf32>
    tpu.vector_store %arg13[%c0_63, %c0_64], %210 {strides = array<i32>} : memref<8x128xf32, #tpu.memory_space<vmem>>, vector<8x128xf32>,
    %c0_65 = arith.constant 0 : index
    %c0_66 = arith.constant 0 : index
    %212 = vector.load %arg14[%c0_65, %c0_66] : memref<8x128xf32, #tpu.memory_space<vmem>>, vector<8x128xf32>
    tpu.vector_store %arg14[%c0_65, %c0_66], %179 {strides = array<i32>} : memref<8x128xf32, #tpu.memory_space<vmem>>, vector<8x128xf32>,
    %c1_i32 = arith.constant 1 : i32
    %213 = arith.cmpi eq, %arg0, %c1_i32 : i32
    %214 = arith.extui %213 : i1 to i32
    %c0_i32_67 = arith.constant 0 : i32
    %215 = arith.cmpi ne, %214, %c0_i32_67 : i32
    scf.if %215 {
      %216 = arith.addf %210, %179 : vector<8x128xf32>
      %217 = arith.mulf %216, %216 : vector<8x128xf32>
      %cst_68 = arith.constant dense<0.000000e+00> : vector<8xf32>
      %218 = vector.multi_reduction <add>, %217, %cst_68 [1] : vector<8x128xf32> to vector<8xf32>
      %219 = vector.shape_cast %218 : vector<8xf32> to vector<8x1xf32>
      %cst_69 = arith.constant 1.280000e+02 : f32
      %220 = vector.broadcast %cst_69 : f32 to vector<8x1xf32>
      %221 = arith.divf %219, %220 : vector<8x1xf32>
      %cst_70 = arith.constant 9.99999997E-7 : f32
      %222 = vector.broadcast %cst_70 : f32 to vector<8x1xf32>
      %223 = arith.addf %221, %222 : vector<8x1xf32>
      %224 = math.rsqrt %223 : vector<8x1xf32>
      %225 = vector.broadcast %224 : vector<8x1xf32> to vector<8x128xf32>
      %226 = arith.mulf %216, %225 : vector<8x128xf32>
      %c0_71 = arith.constant 0 : index
      %c0_72 = arith.constant 0 : index
      %227 = vector.load %arg11[%c0_71, %c0_72] : memref<1x128xf32, #tpu.memory_space<vmem>>, vector<1x128xf32>
      %228 = vector.broadcast %227 : vector<1x128xf32> to vector<8x128xf32>
      %229 = arith.mulf %226, %228 : vector<8x128xf32>
      %c0_73 = arith.constant 0 : index
      %c0_74 = arith.constant 0 : index
      %230 = vector.load %arg12[%c0_73, %c0_74] : memref<8x128xf32, #tpu.memory_space<vmem>>, vector<8x128xf32>
      tpu.vector_store %arg12[%c0_73, %c0_74], %229 {strides = array<i32>} : memref<8x128xf32, #tpu.memory_space<vmem>>, vector<8x128xf32>,
    } else {
    }
    return
  }
  func.func @transform_0(%arg0: i32) -> (i32, i32) {
    %c0_i32 = arith.constant 0 : i32
    %c0_i32_0 = arith.constant 0 : i32
    %c0_i32_1 = arith.constant 0 : i32
    return %c0_i32, %c0_i32_0 : i32, i32
  }
  func.func @transform_1(%arg0: i32) -> (i32, i32) {
    %c0_i32 = arith.constant 0 : i32
    %c0_i32_0 = arith.constant 0 : i32
    %c0_i32_1 = arith.constant 0 : i32
    return %c0_i32, %c0_i32_0 : i32, i32
  }
  func.func @transform_2(%arg0: i32) -> (i32, i32) {
    %c0_i32 = arith.constant 0 : i32
    %c0_i32_0 = arith.constant 0 : i32
    %c0_i32_1 = arith.constant 0 : i32
    return %c0_i32, %c0_i32_0 : i32, i32
  }
  func.func @transform_3(%arg0: i32) -> (i32, i32, i32) {
    %c0_i32 = arith.constant 0 : i32
    %c0_i32_0 = arith.constant 0 : i32
    %c0_i32_1 = arith.constant 0 : i32
    return %arg0, %c0_i32, %c0_i32_0 : i32, i32, i32
  }
  func.func @transform_4(%arg0: i32) -> (i32, i32, i32) {
    %c0_i32 = arith.constant 0 : i32
    %c0_i32_0 = arith.constant 0 : i32
    %c0_i32_1 = arith.constant 0 : i32
    return %arg0, %c0_i32, %c0_i32_0 : i32, i32, i32
  }
  func.func @transform_5(%arg0: i32) -> (i32, i32, i32) {
    %c0_i32 = arith.constant 0 : i32
    %c0_i32_0 = arith.constant 0 : i32
    %c0_i32_1 = arith.constant 0 : i32
    return %arg0, %c0_i32, %c0_i32_0 : i32, i32, i32
  }
  func.func @transform_6(%arg0: i32) -> (i32, i32, i32) {
    %c0_i32 = arith.constant 0 : i32
    %c0_i32_0 = arith.constant 0 : i32
    %c0_i32_1 = arith.constant 0 : i32
    return %arg0, %c0_i32, %c0_i32_0 : i32, i32, i32
  }
  func.func @transform_7(%arg0: i32) -> (i32, i32, i32) {
    %c0_i32 = arith.constant 0 : i32
    %c0_i32_0 = arith.constant 0 : i32
    %c0_i32_1 = arith.constant 0 : i32
    return %arg0, %c0_i32, %c0_i32_0 : i32, i32, i32
  }
  func.func @transform_8(%arg0: i32) -> (i32, i32, i32) {
    %c0_i32 = arith.constant 0 : i32
    %c0_i32_0 = arith.constant 0 : i32
    %c0_i32_1 = arith.constant 0 : i32
    return %arg0, %c0_i32, %c0_i32_0 : i32, i32, i32
  }
  func.func @transform_9(%arg0: i32) -> (i32, i32, i32) {
    %c0_i32 = arith.constant 0 : i32
    %c0_i32_0 = arith.constant 0 : i32
    %c0_i32_1 = arith.constant 0 : i32
    return %arg0, %c0_i32, %c0_i32_0 : i32, i32, i32
  }
  func.func @transform_10(%arg0: i32) -> (i32, i32) {
    %c0_i32 = arith.constant 0 : i32
    %c0_i32_0 = arith.constant 0 : i32
    %c0_i32_1 = arith.constant 0 : i32
    return %c0_i32, %c0_i32_0 : i32, i32
  }
  func.func @transform_11(%arg0: i32) -> (i32, i32) {
    %c0_i32 = arith.constant 0 : i32
    %c0_i32_0 = arith.constant 0 : i32
    %c0_i32_1 = arith.constant 0 : i32
    return %c0_i32, %c0_i32_0 : i32, i32
  }
}

</mosaic_0001>

<llo_original>
// kernel: tpu_custom_call.1
$region0: #{tpu_custom_call.1}
  #allocation0 [shape = 'u32[]', space=smem, size = 0x4, offset = 0x4, fixed_abs, tag = 'smem constant byte address 0x4 - core index']
  #allocation1 [shape = 'u32[144,128]{1,0:T(1,128)}', space=vmem, size = 0x12000, scoped, tag = 'internal scratch']
  #allocation2 [shape = 'f32[8,128]{1,0:T(8,128)}', space=vmem, size = 0x1000, scoped, tag = 'scratch operand']
  #allocation3 [shape = 'f32[8,128]{1,0:T(8,128)}', space=vmem, size = 0x1000, scoped, tag = 'scratch operand']
  %s0 = inlined_call_operand.hbm [shape: f32[8,128], index: 0, kind: input, shape index: {}]
  %s1 = inlined_call_operand.hbm [shape: f32[8,16], index: 1, kind: input, shape index: {}]
  %s2 = inlined_call_operand.hbm [shape: f32[8,16], index: 2, kind: input, shape index: {}]
  %s3 = inlined_call_operand.vmem [shape: f32[2,1,128], index: 3, kind: input, shape index: {}]
  %s4 = inlined_call_operand.hbm [shape: bf16[2,128,256], index: 4, kind: input, shape index: {}]
  %s5 = inlined_call_operand.vmem [shape: f32[2,1,256], index: 5, kind: input, shape index: {}]
  %s6 = inlined_call_operand.hbm [shape: bf16[2,128,128], index: 6, kind: input, shape index: {}]
  %s7 = inlined_call_operand.vmem [shape: f32[2,1,128], index: 7, kind: input, shape index: {}]
  %s8 = inlined_call_operand.hbm [shape: bf16[2,128,512], index: 8, kind: input, shape index: {}]
  %s9 = inlined_call_operand.hbm [shape: bf16[2,256,128], index: 9, kind: input, shape index: {}]
  %s10 = inlined_call_operand.vmem [shape: f32[1,128], index: 10, kind: input, shape index: {}]
  %s11 = inlined_call_operand.hbm [shape: f32[8,128], index: 11, kind: output, shape index: {}]
  %s12 = sld [smem:[#allocation0]]
  $region113: #{tpu_custom_call.1} parent=0
    _
  %s14 = ssub.s32 1, %s12
  %s15 = scalar_select 0, %s14, %s12
  $region1: #{tpu_custom_call.1} parent=0
    #allocation4 [shape = 'u8[4096]{0}', space=vmem, size = 0x1000, scoped, tag = 'input window, operand 0, single buffered']
    #allocation5 [shape = 's32[2]{0}', space=sflag, size = 0x8, scoped, tag = 'scoped memory for tpu_custom_call.1']
    #allocation6 [shape = 's32[2]{0}', space=sflag, size = 0x8, scoped, tag = 'scoped memory for tpu_custom_call.1']
    #allocation7 [shape = 'u8[4096]{0}', space=vmem, size = 0x1000, scoped, tag = 'input window, operand 1, single buffered']
    #allocation8 [shape = 's32[1]{0}', space=sflag, size = 0x4, scoped, tag = 'scoped memory for tpu_custom_call.1']
    #allocation9 [shape = 'u8[4096]{0}', space=vmem, size = 0x1000, scoped, tag = 'input window, operand 2, single buffered']
    #allocation10 [shape = 'u8[131072]{0}', space=vmem, size = 0x20000, scoped, tag = 'input window, operand 4']
    #allocation11 [shape = 's32[2]{0}', space=sflag, size = 0x8, scoped, tag = 'scoped memory for tpu_custom_call.1']
    #allocation12 [shape = 'u8[65536]{0}', space=vmem, size = 0x10000, scoped, tag = 'input window, operand 6']
    #allocation13 [shape = 'u8[262144]{0}', space=vmem, size = 0x40000, scoped, tag = 'input window, operand 8']
    #allocation14 [shape = 's32[2]{0}', space=sflag, size = 0x8, scoped, tag = 'scoped memory for tpu_custom_call.1']
    #allocation15 [shape = 'u8[131072]{0}', space=vmem, size = 0x20000, scoped, tag = 'input window, operand 9']
    #allocation16 [shape = 'u8[4096]{0}', space=vmem, size = 0x1000, scoped, tag = 'output window, operand 0, single buffered']
    %16 = vsyncpa [#allocation5], 0
    %17 = vsyncpa [#allocation8], 0
    %18 = vsyncpa [#allocation11], 0
    %s19 = scalar_lea.sflag [#allocation11], 1
    %20 = vsyncpa %s19, 0
    %21 = vsyncpa [#allocation14], 0
    %s22 = scalar_lea.sflag [#allocation14], 1
    %23 = vsyncpa %s22, 0
    %24 = vsyncpa [#allocation6], 0
    loop: start=0, step=1, limit=4
    $region2: #{tpu_custom_call.1} parent=1 // loop_pre_header
      _
    $region3: #{tpu_custom_call.1} parent=1 // loop_header
      %s26 = sphi 0, %s30
      %p27 = scmp.ge.s32.totalorder %s26, 4
      %s34 = sphi 0, %s34
      %s36 = sphi 0, %s34
      %s37 = sphi 0, %s36
      %s51 = sphi 0, %s37
      %s55 = sphi 0, %s55
      %s57 = sphi 0, %s55
      %s58 = sphi 0, %s57
      %s72 = sphi 0, %s58
      %s76 = sphi 0, %s76
      %s78 = sphi 0, %s76
      %s79 = sphi 0, %s78
      %s93 = sphi 0, %s79
      %s99 = sphi 0, %s101
      %s102 = sphi 0, %s99
      %s103 = sphi 0, %s102
      %s119 = sphi 0, %s103
      %s125 = sphi 0, %s127
      %s128 = sphi 0, %s125
      %s129 = sphi 0, %s128
      %s145 = sphi 0, %s129
      %s151 = sphi 0, %s153
      %s154 = sphi 0, %s151
      %s155 = sphi 0, %s154
      %s171 = sphi 0, %s155
      %s177 = sphi 0, %s179
      %s180 = sphi 0, %s177
      %s181 = sphi 0, %s180
      %s197 = sphi 0, %s181
      %s203 = sphi 0, %s205
      %s206 = sphi 0, %s203
      %s207 = sphi 0, %s206
      %s223 = sphi 0, %s207
      %s229 = sphi 0, %s231
      %s232 = sphi 0, %s229
      %s233 = sphi 0, %s232
      %s249 = sphi 0, %s233
      %s255 = sphi 0, %s257
      %s258 = sphi 0, %s255
      %s259 = sphi 0, %s258
      %s275 = sphi 0, %s259
      %s279 = sphi 0, %s279
      %s281 = sphi 0, %s279
      %s282 = sphi 0, %s281
      %s296 = sphi 0, %s282
      %s300 = sphi 0, %s300
      %s302 = sphi 0, %s300
      %s303 = sphi 0, %s302
      %s317 = sphi 0, %s303
    $region4: #{tpu_custom_call.1} parent=1 // loop_header_branch
      %29 = sbr.rel (%p27) target = $region8
    $region5: #{tpu_custom_call.1} parent=1 // loop_body
      %s31 = ssub.s32 %s26, 1
      %s32 = ssub.s32 %s26, 2
      %s33 = sadd.s32 %s26, 1
      %s35 = sadd.s32 %s34, 1
      %p38 = scmp.eq.s32.totalorder %s26, 1
      %p39 = scmp.ne.s32.totalorder %s34, %s36
      %p40 = scmp.eq.s32.totalorder %s26, 0
      %p41 = por %p39, %p40
      %p42 = scmp.ne.s32.totalorder %s34, %s36
      %p43 = scmp.eq.s32.totalorder %s31, 1
      %p44 = por %p42, %p43
      %p45 = scmp.ne.s32.totalorder %s36, %s37
      %p46 = scmp.eq.s32.totalorder %s31, 0
      %p47 = por %p45, %p46
      %p48 = scmp.ne.s32.totalorder %s36, %s37
      %p49 = scmp.eq.s32.totalorder %s32, 1
      %p50 = por %p48, %p49
      %p52 = scmp.ne.s32.totalorder %s37, %s51
      %p53 = scmp.eq.s32.totalorder %s32, 0
      %p54 = por %p52, %p53
      %s56 = sadd.s32 %s55, 1
      %p59 = scmp.eq.s32.totalorder %s26, 1
      %p60 = scmp.ne.s32.totalorder %s55, %s57
      %p61 = scmp.eq.s32.totalorder %s26, 0
      %p62 = por %p60, %p61
      %p63 = scmp.ne.s32.totalorder %s55, %s57
      %p64 = scmp.eq.s32.totalorder %s31, 1
      %p65 = por %p63, %p64
      %p66 = scmp.ne.s32.totalorder %s57, %s58
      %p67 = scmp.eq.s32.totalorder %s31, 0
      %p68 = por %p66, %p67
      %p69 = scmp.ne.s32.totalorder %s57, %s58
      %p70 = scmp.eq.s32.totalorder %s32, 1
      %p71 = por %p69, %p70
      %p73 = scmp.ne.s32.totalorder %s58, %s72
      %p74 = scmp.eq.s32.totalorder %s32, 0
      %p75 = por %p73, %p74
      %s77 = sadd.s32 %s76, 1
      %p80 = scmp.eq.s32.totalorder %s26, 1
      %p81 = scmp.ne.s32.totalorder %s76, %s78
      %p82 = scmp.eq.s32.totalorder %s26, 0
      %p83 = por %p81, %p82
      %p84 = scmp.ne.s32.totalorder %s76, %s78
      %p85 = scmp.eq.s32.totalorder %s31, 1
      %p86 = por %p84, %p85
      %p87 = scmp.ne.s32.totalorder %s78, %s79
      %p88 = scmp.eq.s32.totalorder %s31, 0
      %p89 = por %p87, %p88
      %p90 = scmp.ne.s32.totalorder %s78, %s79
      %p91 = scmp.eq.s32.totalorder %s32, 1
      %p92 = por %p90, %p91
      %p94 = scmp.ne.s32.totalorder %s79, %s93
      %p95 = scmp.eq.s32.totalorder %s32, 0
      %p96 = por %p94, %p95
      %s97 = ssub.s32 %s26, %s33
      %p98 = scmp.eq.s32.totalorder %s97, 0
      %s100 = sadd.s32 %s99, 1
      %s101 = scalar_select %p98, %s99, %s100
      %p104 = pneg %p98
      %p105 = scmp.eq.s32.totalorder %s26, 1
      %p106 = por %p104, %p105
      %p107 = scmp.ne.s32.totalorder %s99, %s102
      %p108 = scmp.eq.s32.totalorder %s26, 0
      %p109 = por %p107, %p108
      %p110 = scmp.ne.s32.totalorder %s99, %s102
      %p111 = scmp.eq.s32.totalorder %s31, 1
      %p112 = por %p110, %p111
      %p113 = scmp.ne.s32.totalorder %s102, %s103
      %p114 = scmp.eq.s32.totalorder %s31, 0
      %p115 = por %p113, %p114
      %p116 = scmp.ne.s32.totalorder %s102, %s103
      %p117 = scmp.eq.s32.totalorder %s32, 1
      %p118 = por %p116, %p117
      %p120 = scmp.ne.s32.totalorder %s103, %s119
      %p121 = scmp.eq.s32.totalorder %s32, 0
      %p122 = por %p120, %p121
      %s123 = ssub.s32 %s26, %s33
      %p124 = scmp.eq.s32.totalorder %s123, 0
      %s126 = sadd.s32 %s125, 1
      %s127 = scalar_select %p124, %s125, %s126
      %p130 = pneg %p124
      %p131 = scmp.eq.s32.totalorder %s26, 1
      %p132 = por %p130, %p131
      %p133 = scmp.ne.s32.totalorder %s125, %s128
      %p134 = scmp.eq.s32.totalorder %s26, 0
      %p135 = por %p133, %p134
      %p136 = scmp.ne.s32.totalorder %s125, %s128
      %p137 = scmp.eq.s32.totalorder %s31, 1
      %p138 = por %p136, %p137
      %p139 = scmp.ne.s32.totalorder %s128, %s129
      %p140 = scmp.eq.s32.totalorder %s31, 0
      %p141 = por %p139, %p140
      %p142 = scmp.ne.s32.totalorder %s128, %s129
      %p143 = scmp.eq.s32.totalorder %s32, 1
      %p144 = por %p142, %p143
      %p146 = scmp.ne.s32.totalorder %s129, %s145
      %p147 = scmp.eq.s32.totalorder %s32, 0
      %p148 = por %p146, %p147
      %s149 = ssub.s32 %s26, %s33
      %p150 = scmp.eq.s32.totalorder %s149, 0
      %s152 = sadd.s32 %s151, 1
      %s153 = scalar_select %p150, %s151, %s152
      %p156 = pneg %p150
      %p157 = scmp.eq.s32.totalorder %s26, 1
      %p158 = por %p156, %p157
      %p159 = scmp.ne.s32.totalorder %s151, %s154
      %p160 = scmp.eq.s32.totalorder %s26, 0
      %p161 = por %p159, %p160
      %p162 = scmp.ne.s32.totalorder %s151, %s154
      %p163 = scmp.eq.s32.totalorder %s31, 1
      %p164 = por %p162, %p163
      %p165 = scmp.ne.s32.totalorder %s154, %s155
      %p166 = scmp.eq.s32.totalorder %s31, 0
      %p167 = por %p165, %p166
      %p168 = scmp.ne.s32.totalorder %s154, %s155
      %p169 = scmp.eq.s32.totalorder %s32, 1
      %p170 = por %p168, %p169
      %p172 = scmp.ne.s32.totalorder %s155, %s171
      %p173 = scmp.eq.s32.totalorder %s32, 0
      %p174 = por %p172, %p173
      %s175 = ssub.s32 %s26, %s33
      %p176 = scmp.eq.s32.totalorder %s175, 0
      %s178 = sadd.s32 %s177, 1
      %s179 = scalar_select %p176, %s177, %s178
      %p182 = pneg %p176
      %p183 = scmp.eq.s32.totalorder %s26, 1
      %p184 = por %p182, %p183
      %p185 = scmp.ne.s32.totalorder %s177, %s180
      %p186 = scmp.eq.s32.totalorder %s26, 0
      %p187 = por %p185, %p186
      %p188 = scmp.ne.s32.totalorder %s177, %s180
      %p189 = scmp.eq.s32.totalorder %s31, 1
      %p190 = por %p188, %p189
      %p191 = scmp.ne.s32.totalorder %s180, %s181
      %p192 = scmp.eq.s32.totalorder %s31, 0
      %p193 = por %p191, %p192
      %p194 = scmp.ne.s32.totalorder %s180, %s181
      %p195 = scmp.eq.s32.totalorder %s32, 1
      %p196 = por %p194, %p195
      %p198 = scmp.ne.s32.totalorder %s181, %s197
      %p199 = scmp.eq.s32.totalorder %s32, 0
      %p200 = por %p198, %p199
      %s201 = ssub.s32 %s26, %s33
      %p202 = scmp.eq.s32.totalorder %s201, 0
      %s204 = sadd.s32 %s203, 1
      %s205 = scalar_select %p202, %s203, %s204
      %p208 = pneg %p202
      %p209 = scmp.eq.s32.totalorder %s26, 1
      %p210 = por %p208, %p209
      %p211 = scmp.ne.s32.totalorder %s203, %s206
      %p212 = scmp.eq.s32.totalorder %s26, 0
      %p213 = por %p211, %p212
      %p214 = scmp.ne.s32.totalorder %s203, %s206
      %p215 = scmp.eq.s32.totalorder %s31, 1
      %p216 = por %p214, %p215
      %p217 = scmp.ne.s32.totalorder %s206, %s207
      %p218 = scmp.eq.s32.totalorder %s31, 0
      %p219 = por %p217, %p218
      %p220 = scmp.ne.s32.totalorder %s206, %s207
      %p221 = scmp.eq.s32.totalorder %s32, 1
      %p222 = por %p220, %p221
      %p224 = scmp.ne.s32.totalorder %s207, %s223
      %p225 = scmp.eq.s32.totalorder %s32, 0
      %p226 = por %p224, %p225
      %s227 = ssub.s32 %s26, %s33
      %p228 = scmp.eq.s32.totalorder %s227, 0
      %s230 = sadd.s32 %s229, 1
      %s231 = scalar_select %p228, %s229, %s230
      %p234 = pneg %p228
      %p235 = scmp.eq.s32.totalorder %s26, 1
      %p236 = por %p234, %p235
      %p237 = scmp.ne.s32.totalorder %s229, %s232
      %p238 = scmp.eq.s32.totalorder %s26, 0
      %p239 = por %p237, %p238
      %p240 = scmp.ne.s32.totalorder %s229, %s232
      %p241 = scmp.eq.s32.totalorder %s31, 1
      %p242 = por %p240, %p241
      %p243 = scmp.ne.s32.totalorder %s232, %s233
      %p244 = scmp.eq.s32.totalorder %s31, 0
      %p245 = por %p243, %p244
      %p246 = scmp.ne.s32.totalorder %s232, %s233
      %p247 = scmp.eq.s32.totalorder %s32, 1
      %p248 = por %p246, %p247
      %p250 = scmp.ne.s32.totalorder %s233, %s249
      %p251 = scmp.eq.s32.totalorder %s32, 0
      %p252 = por %p250, %p251
      %s253 = ssub.s32 %s26, %s33
      %p254 = scmp.eq.s32.totalorder %s253, 0
      %s256 = sadd.s32 %s255, 1
      %s257 = scalar_select %p254, %s255, %s256
      %p260 = pneg %p254
      %p261 = scmp.eq.s32.totalorder %s26, 1
      %p262 = por %p260, %p261
      %p263 = scmp.ne.s32.totalorder %s255, %s258
      %p264 = scmp.eq.s32.totalorder %s26, 0
      %p265 = por %p263, %p264
      %p266 = scmp.ne.s32.totalorder %s255, %s258
      %p267 = scmp.eq.s32.totalorder %s31, 1
      %p268 = por %p266, %p267
      %p269 = scmp.ne.s32.totalorder %s258, %s259
      %p270 = scmp.eq.s32.totalorder %s31, 0
      %p271 = por %p269, %p270
      %p272 = scmp.ne.s32.totalorder %s258, %s259
      %p273 = scmp.eq.s32.totalorder %s32, 1
      %p274 = por %p272, %p273
      %p276 = scmp.ne.s32.totalorder %s259, %s275
      %p277 = scmp.eq.s32.totalorder %s32, 0
      %p278 = por %p276, %p277
      %s280 = sadd.s32 %s279, 1
      %p283 = scmp.eq.s32.totalorder %s26, 1
      %p284 = scmp.ne.s32.totalorder %s279, %s281
      %p285 = scmp.eq.s32.totalorder %s26, 0
      %p286 = por %p284, %p285
      %p287 = scmp.ne.s32.totalorder %s279, %s281
      %p288 = scmp.eq.s32.totalorder %s31, 1
      %p289 = por %p287, %p288
      %p290 = scmp.ne.s32.totalorder %s281, %s282
      %p291 = scmp.eq.s32.totalorder %s31, 0
      %p292 = por %p290, %p291
      %p293 = scmp.ne.s32.totalorder %s281, %s282
      %p294 = scmp.eq.s32.totalorder %s32, 1
      %p295 = por %p293, %p294
      %p297 = scmp.ne.s32.totalorder %s282, %s296
      %p298 = scmp.eq.s32.totalorder %s32, 0
      %p299 = por %p297, %p298
      %s301 = sadd.s32 %s300, 1
      %p304 = scmp.eq.s32.totalorder %s26, 1
      %p305 = scmp.ne.s32.totalorder %s300, %s302
      %p306 = scmp.eq.s32.totalorder %s26, 0
      %p307 = por %p305, %p306
      %p308 = scmp.ne.s32.totalorder %s300, %s302
      %p309 = scmp.eq.s32.totalorder %s31, 1
      %p310 = por %p308, %p309
      %p311 = scmp.ne.s32.totalorder %s302, %s303
      %p312 = scmp.eq.s32.totalorder %s31, 0
      %p313 = por %p311, %p312
      %p314 = scmp.ne.s32.totalorder %s302, %s303
      %p315 = scmp.eq.s32.totalorder %s32, 1
      %p316 = por %p314, %p315
      %p318 = scmp.ne.s32.totalorder %s303, %s317
      %p319 = scmp.eq.s32.totalorder %s32, 0
      %p320 = por %p318, %p319
      %p321 = scmp.le.s32.totalorder 1, %s26
      %p322 = scmp.lt.s32.totalorder %s26, 3
      %p323 = pnand %p321, %p322
      %p324 = pneg %p323
      // Predicated region
      $region9: #{tpu_custom_call.1} parent=5 // pred_check
        _
      $region10: #{tpu_custom_call.1} parent=5 // pred_check_branch
        %326 = sbr.rel (%p323) target = $region12
      $region11: #{tpu_custom_call.1} parent=5 // pred_region
        %s327 = ssub.s32 %s26, 1
        // Predicated region
        $region13: #{tpu_custom_call.1} parent=11 // pred_check
          %p328 = pneg %p47
        $region14: #{tpu_custom_call.1} parent=11 // pred_check_branch
          %330 = sbr.rel (%p328) target = $region16
        $region15: #{tpu_custom_call.1} parent=11 // pred_region
          %s332 = ssub.s32 128, 128
          %333 = vsyncadd [#allocation5], %s332
          %s335 = sshll.u32 [#allocation4], 4
          %s336 = int_to_ptr.vmem [resolvable:$true] %s335
          %338 = dma.hbm_to_vmem [thread:$0]  %s0, 128, %s336, [#allocation5]
        $region16: #{tpu_custom_call.1} parent=11 // pred_fallthru
          _
        // Predicated region
        $region17: #{tpu_custom_call.1} parent=11 // pred_check
          %p339 = pneg %p68
        $region18: #{tpu_custom_call.1} parent=11 // pred_check_branch
          %341 = sbr.rel (%p339) target = $region20
        $region19: #{tpu_custom_call.1} parent=11 // pred_region
          %s343 = ssub.s32 128, 128
          %344 = vsyncadd [#allocation8], %s343
          %s346 = sshll.u32 [#allocation7], 4
          %s347 = int_to_ptr.vmem [resolvable:$true] %s346
          %349 = dma.hbm_to_vmem [thread:$0]  %s1, 128, %s347, [#allocation8]
        $region20: #{tpu_custom_call.1} parent=11 // pred_fallthru
          _
        // Predicated region
        $region21: #{tpu_custom_call.1} parent=11 // pred_check
          %p350 = pneg %p89
        $region22: #{tpu_custom_call.1} parent=11 // pred_check_branch
          %352 = sbr.rel (%p350) target = $region24
        $region23: #{tpu_custom_call.1} parent=11 // pred_region
          %s354 = ssub.s32 128, 128
          %355 = vsyncadd [#allocation8], %s354
          %s357 = sshll.u32 [#allocation9], 4
          %s358 = int_to_ptr.vmem [resolvable:$true] %s357
          %360 = dma.hbm_to_vmem [thread:$0]  %s2, 128, %s358, [#allocation8]
        $region24: #{tpu_custom_call.1} parent=11 // pred_fallthru
          _
        // Predicated region
        $region25: #{tpu_custom_call.1} parent=11 // pred_check
          %p361 = pneg %p292
        $region26: #{tpu_custom_call.1} parent=11 // pred_check_branch
          %363 = sbr.rel (%p361) target = $region28
        $region27: #{tpu_custom_call.1} parent=11 // pred_region
          _
        $region28: #{tpu_custom_call.1} parent=11 // pred_fallthru
          _
      $region12: #{tpu_custom_call.1} parent=5 // pred_fallthru
        _
      %p364 = scmp.lt.s32.totalorder %s26, 2
      // Predicated region
      $region29: #{tpu_custom_call.1} parent=5 // pred_check
        %p365 = pneg %p364
      $region30: #{tpu_custom_call.1} parent=5 // pred_check_branch
        %367 = sbr.rel (%p365) target = $region32
      $region31: #{tpu_custom_call.1} parent=5 // pred_region
        // Predicated region
        $region33: #{tpu_custom_call.1} parent=31 // pred_check
          %p368 = pneg %p109
        $region34: #{tpu_custom_call.1} parent=31 // pred_check_branch
          %370 = sbr.rel (%p368) target = $region36
        $region35: #{tpu_custom_call.1} parent=31 // pred_region
          %p371 = scmp.lt.s32.totalorder %s26, 1
          %s372 = scalar_select %p371, %s26, 1
          %s373 = scalar_lea.vmem %s3, %s372
        $region36: #{tpu_custom_call.1} parent=31 // pred_fallthru
          _
        // Predicated region
        $region37: #{tpu_custom_call.1} parent=31 // pred_check
          %p374 = pneg %p135
        $region38: #{tpu_custom_call.1} parent=31 // pred_check_branch
          %376 = sbr.rel (%p374) target = $region40
        $region39: #{tpu_custom_call.1} parent=31 // pred_region
          %s377 = sand.u32 %s26, 1
          %s378 = scalar_lea.sflag [#allocation11], %s377
          %s379 = sand.u32 %s125, 1
          %s380 = smul.addr %s379, 128
          %s381 = scalar_lea.vmem [#allocation10], %s380
          %s383 = ssub.s32 2048, 2048
          %384 = vsyncadd %s378, %s383
          %s385 = smul.addr %s26, 32
          %s386 = smul.addr %s385, 64
          %s387 = scalar_lea.hbm %s4, %s386
          %s388 = sshll.u32 %s381, 4
          %s389 = int_to_ptr.vmem [resolvable:$true] %s388
          %394 = dma.hbm_to_vmem [thread:$0]  %s387, 2048, %s389, %s378, 128, 128, 8
        $region40: #{tpu_custom_call.1} parent=31 // pred_fallthru
          _
        // Predicated region
        $region41: #{tpu_custom_call.1} parent=31 // pred_check
          %p395 = pneg %p161
        $region42: #{tpu_custom_call.1} parent=31 // pred_check_branch
          %397 = sbr.rel (%p395) target = $region44
        $region43: #{tpu_custom_call.1} parent=31 // pred_region
          %p398 = scmp.lt.s32.totalorder %s26, 1
          %s399 = scalar_select %p398, %s26, 1
          %s400 = smul.addr %s399, 2
          %s401 = scalar_lea.vmem %s5, %s400
        $region44: #{tpu_custom_call.1} parent=31 // pred_fallthru
          _
        // Predicated region
        $region45: #{tpu_custom_call.1} parent=31 // pred_check
          %p402 = pneg %p187
        $region46: #{tpu_custom_call.1} parent=31 // pred_check_branch
          %404 = sbr.rel (%p402) target = $region48
        $region47: #{tpu_custom_call.1} parent=31 // pred_region
          %s405 = sand.u32 %s26, 1
          %s406 = scalar_lea.sflag [#allocation11], %s405
          %s407 = sand.u32 %s177, 1
          %s408 = smul.addr %s407, 64
          %s409 = scalar_lea.vmem [#allocation12], %s408
          %s411 = ssub.s32 1024, 1024
          %412 = vsyncadd %s406, %s411
          %s413 = smul.addr %s26, 16
          %s414 = smul.addr %s413, 64
          %s415 = scalar_lea.hbm %s6, %s414
          %s416 = sshll.u32 %s409, 4
          %s417 = int_to_ptr.vmem [resolvable:$true] %s416
          %422 = dma.hbm_to_vmem [thread:$0]  %s415, 1024, %s417, %s406, 64, 64, 4
        $region48: #{tpu_custom_call.1} parent=31 // pred_fallthru
          _
        // Predicated region
        $region49: #{tpu_custom_call.1} parent=31 // pred_check
          %p423 = pneg %p213
        $region50: #{tpu_custom_call.1} parent=31 // pred_check_branch
          %425 = sbr.rel (%p423) target = $region52
        $region51: #{tpu_custom_call.1} parent=31 // pred_region
          %p426 = scmp.lt.s32.totalorder %s26, 1
          %s427 = scalar_select %p426, %s26, 1
          %s428 = scalar_lea.vmem %s7, %s427
        $region52: #{tpu_custom_call.1} parent=31 // pred_fallthru
          _
        // Predicated region
        $region53: #{tpu_custom_call.1} parent=31 // pred_check
          %p429 = pneg %p239
        $region54: #{tpu_custom_call.1} parent=31 // pred_check_branch
          %431 = sbr.rel (%p429) target = $region56
        $region55: #{tpu_custom_call.1} parent=31 // pred_region
          %s432 = sand.u32 %s26, 1
          %s433 = scalar_lea.sflag [#allocation14], %s432
          %s434 = sand.u32 %s229, 1
          %s435 = smul.addr %s434, 256
          %s436 = scalar_lea.vmem [#allocation13], %s435
          %s438 = ssub.s32 4096, 4096
          %439 = vsyncadd %s433, %s438
          %s440 = smul.addr %s26, 64
          %s441 = smul.addr %s440, 64
          %s442 = scalar_lea.hbm %s8, %s441
          %s443 = sshll.u32 %s436, 4
          %s444 = int_to_ptr.vmem [resolvable:$true] %s443
          %449 = dma.hbm_to_vmem [thread:$0]  %s442, 4096, %s444, %s433, 256, 256, 16
        $region56: #{tpu_custom_call.1} parent=31 // pred_fallthru
          _
        // Predicated region
        $region57: #{tpu_custom_call.1} parent=31 // pred_check
          %p450 = pneg %p265
        $region58: #{tpu_custom_call.1} parent=31 // pred_check_branch
          %452 = sbr.rel (%p450) target = $region60
        $region59: #{tpu_custom_call.1} parent=31 // pred_region
          %s453 = sand.u32 %s26, 1
          %s454 = scalar_lea.sflag [#allocation14], %s453
          %s455 = sand.u32 %s255, 1
          %s456 = smul.addr %s455, 128
          %s457 = scalar_lea.vmem [#allocation15], %s456
          %s459 = ssub.s32 2048, 2048
          %460 = vsyncadd %s454, %s459
          %s461 = smul.addr %s26, 32
          %s462 = smul.addr %s461, 64
          %s463 = scalar_lea.hbm %s9, %s462
          %s464 = sshll.u32 %s457, 4
          %s465 = int_to_ptr.vmem [resolvable:$true] %s464
          %470 = dma.hbm_to_vmem [thread:$0]  %s463, 2048, %s465, %s454, 64, 64, 4
        $region60: #{tpu_custom_call.1} parent=31 // pred_fallthru
          _
      $region32: #{tpu_custom_call.1} parent=5 // pred_fallthru
        _
      %p471 = scmp.le.s32.totalorder 1, %s26
      %p472 = scmp.lt.s32.totalorder %s26, 3
      %p473 = pnand %p471, %p472
      %p474 = pneg %p473
      // Predicated region
      $region61: #{tpu_custom_call.1} parent=5 // pred_check
        _
      $region62: #{tpu_custom_call.1} parent=5 // pred_check_branch
        %476 = sbr.rel (%p473) target = $region64
      $region63: #{tpu_custom_call.1} parent=5 // pred_region
        %s477 = ssub.s32 %s26, 1
        // Predicated region
        $region65: #{tpu_custom_call.1} parent=63 // pred_check
          %p478 = pneg %p47
        $region66: #{tpu_custom_call.1} parent=63 // pred_check_branch
          %480 = sbr.rel (%p478) target = $region68
        $region67: #{tpu_custom_call.1} parent=63 // pred_region
          %481 = dma.done [#allocation5], 128
        $region68: #{tpu_custom_call.1} parent=63 // pred_fallthru
          _
        // Predicated region
        $region69: #{tpu_custom_call.1} parent=63 // pred_check
          %p482 = pneg %p68
        $region70: #{tpu_custom_call.1} parent=63 // pred_check_branch
          %484 = sbr.rel (%p482) target = $region72
        $region71: #{tpu_custom_call.1} parent=63 // pred_region
          %485 = dma.done [#allocation8], 128
        $region72: #{tpu_custom_call.1} parent=63 // pred_fallthru
          _
        // Predicated region
        $region73: #{tpu_custom_call.1} parent=63 // pred_check
          %p486 = pneg %p89
        $region74: #{tpu_custom_call.1} parent=63 // pred_check_branch
          %488 = sbr.rel (%p486) target = $region76
        $region75: #{tpu_custom_call.1} parent=63 // pred_region
          %489 = dma.done [#allocation8], 128
        $region76: #{tpu_custom_call.1} parent=63 // pred_fallthru
          _
        %s490 = sand.u32 %s31, 1
        %s491 = scalar_lea.sflag [#allocation11], %s490
        %s492 = sand.u32 %s128, 1
        %s493 = smul.addr %s492, 128
        %s494 = scalar_lea.vmem [#allocation10], %s493
        // Predicated region
        $region77: #{tpu_custom_call.1} parent=63 // pred_check
          %p495 = pneg %p141
        $region78: #{tpu_custom_call.1} parent=63 // pred_check_branch
          %497 = sbr.rel (%p495) target = $region80
        $region79: #{tpu_custom_call.1} parent=63 // pred_region
          %498 = dma.done %s491, 2048
        $region80: #{tpu_custom_call.1} parent=63 // pred_fallthru
          _
        %s499 = sand.u32 %s31, 1
        %s500 = scalar_lea.sflag [#allocation11], %s499
        %s501 = sand.u32 %s180, 1
        %s502 = smul.addr %s501, 64
        %s503 = scalar_lea.vmem [#allocation12], %s502
        // Predicated region
        $region81: #{tpu_custom_call.1} parent=63 // pred_check
          %p504 = pneg %p193
        $region82: #{tpu_custom_call.1} parent=63 // pred_check_branch
          %506 = sbr.rel (%p504) target = $region84
        $region83: #{tpu_custom_call.1} parent=63 // pred_region
          %507 = dma.done %s500, 1024
        $region84: #{tpu_custom_call.1} parent=63 // pred_fallthru
          _
        %s508 = sand.u32 %s31, 1
        %s509 = scalar_lea.sflag [#allocation14], %s508
        %s510 = sand.u32 %s232, 1
        %s511 = smul.addr %s510, 256
        %s512 = scalar_lea.vmem [#allocation13], %s511
        // Predicated region
        $region85: #{tpu_custom_call.1} parent=63 // pred_check
          %p513 = pneg %p245
        $region86: #{tpu_custom_call.1} parent=63 // pred_check_branch
          %515 = sbr.rel (%p513) target = $region88
        $region87: #{tpu_custom_call.1} parent=63 // pred_region
          %516 = dma.done %s509, 4096
        $region88: #{tpu_custom_call.1} parent=63 // pred_fallthru
          _
        %s517 = sand.u32 %s31, 1
        %s518 = scalar_lea.sflag [#allocation14], %s517
        %s519 = sand.u32 %s258, 1
        %s520 = smul.addr %s519, 128
        %s521 = scalar_lea.vmem [#allocation15], %s520
        // Predicated region
        $region89: #{tpu_custom_call.1} parent=63 // pred_check
          %p522 = pneg %p271
        $region90: #{tpu_custom_call.1} parent=63 // pred_check_branch
          %524 = sbr.rel (%p522) target = $region92
        $region91: #{tpu_custom_call.1} parent=63 // pred_region
          %525 = dma.done %s518, 2048
        $region92: #{tpu_custom_call.1} parent=63 // pred_fallthru
          _
        %p526 = pneg %p47
        %p527 = pneg %p44
        %p528 = pneg %p68
        %p529 = pneg %p65
        %p530 = pneg %p89
        %p531 = pneg %p86
        %p532 = scmp.lt.s32.totalorder %s31, 1
        %s533 = scalar_select %p532, %s31, 1
        %s534 = scalar_lea.vmem %s3, %s533
        %p535 = pneg %p115
        %p536 = pneg %p112
        %s537 = sand.u32 %s31, 1
        %s538 = scalar_lea.sflag [#allocation11], %s537
        %s539 = sand.u32 %s128, 1
        %s540 = smul.addr %s539, 128
        %s541 = scalar_lea.vmem [#allocation10], %s540
        %p542 = pneg %p141
        %p543 = pneg %p138
        %p544 = scmp.lt.s32.totalorder %s31, 1
        %s545 = scalar_select %p544, %s31, 1
        %s546 = smul.addr %s545, 2
        %s547 = scalar_lea.vmem %s5, %s546
        %p548 = pneg %p167
        %p549 = pneg %p164
        %s550 = sand.u32 %s31, 1
        %s551 = scalar_lea.sflag [#allocation11], %s550
        %s552 = sand.u32 %s180, 1
        %s553 = smul.addr %s552, 64
        %s554 = scalar_lea.vmem [#allocation12], %s553
        %p555 = pneg %p193
        %p556 = pneg %p190
        %p557 = scmp.lt.s32.totalorder %s31, 1
        %s558 = scalar_select %p557, %s31, 1
        %s559 = scalar_lea.vmem %s7, %s558
        %p560 = pneg %p219
        %p561 = pneg %p216
        %s562 = sand.u32 %s31, 1
        %s563 = scalar_lea.sflag [#allocation14], %s562
        %s564 = sand.u32 %s232, 1
        %s565 = smul.addr %s564, 256
        %s566 = scalar_lea.vmem [#allocation13], %s565
        %p567 = pneg %p245
        %p568 = pneg %p242
        %s569 = sand.u32 %s31, 1
        %s570 = scalar_lea.sflag [#allocation14], %s569
        %s571 = sand.u32 %s258, 1
        %s572 = smul.addr %s571, 128
        %s573 = scalar_lea.vmem [#allocation15], %s572
        %p574 = pneg %p271
        %p575 = pneg %p268
        %p576 = pneg %p292
        %p577 = pneg %p289
        %p578 = pneg %p313
        %p579 = pneg %p310
        %p580 = scmp.lt.s32.totalorder %s31, 1
        %s581 = scalar_select %p580, %s31, 1
        %s582 = scalar_lea.vmem %s3, %s581
        %p583 = scmp.lt.s32.totalorder %s31, 1
        %s584 = scalar_select %p583, %s31, 1
        %s585 = smul.addr %s584, 2
        %s586 = scalar_lea.vmem %s5, %s585
        %p587 = scmp.lt.s32.totalorder %s31, 1
        %s588 = scalar_select %p587, %s31, 1
        %s589 = scalar_lea.vmem %s7, %s588
        %p591 = scmp.eq.s32.totalorder %s31, 0
        // Predicated region
        $region93: #{tpu_custom_call.1} parent=63 // pred_check
          %p592 = pneg %p591
        $region94: #{tpu_custom_call.1} parent=63 // pred_check_branch
          %594 = sbr.rel (%p592) target = $region96
        $region95: #{tpu_custom_call.1} parent=63 // pred_region
          %v595 = vld [vmem:[#allocation4] sm:$0xff]
          %596 = vst [vmem:[#allocation2] sm:$0xff] %v595
          %597 = vst [vmem:[#allocation3] sm:$0xff] 0.0
        $region96: #{tpu_custom_call.1} parent=63 // pred_fallthru
          _
        %v598 = vld [vmem:[#allocation7] sm:$0xff]
        %v599 = vld [vmem:[#allocation9] sm:$0xff]
        %v600 = vld [vmem:[#allocation2] sm:$0xff]
        %v601 = vld [vmem:[#allocation3] sm:$0xff]
        %v602 = vadd.f32 %v600, %v601
        %v603 = vld [vmem:[%s582] sm:$0x1]
        %v604 = vmul.f32 %v602, %v602
        %605 = vadd.xlane.f32.xlu0 %v604
        %v606 = vpop.xlane.xlu0 %605
        %v607 = vrcp.pop 128.0
        %v608 = vmul.f32 %v606, %v607
        %v609 = vadd.f32 %v608, 1e-06
        %v610 = vrsqrt.pop %v609
        %v611 = vmul.f32 %v602, %v610
        %v613 = vlaneseq
        %v614 = vshrl.u32 %v613, 7
        %v615 = vsub.s32 0, %v614
        %v616 = vrot.slane %v603, %v615
        %v618 = vmul.f32 %v611, %v616
        %v619 = vpack.c.bf16 %v618, %v618
        %v620 = vld [vmem:[%s494] sm:$0xff]
        %v621 = vld [vmem:[%s494 + $0x8] sm:$0xff]
        %v622 = vld [vmem:[%s494 + $0x10] sm:$0xff]
        %v623 = vld [vmem:[%s494 + $0x18] sm:$0xff]
        %v624 = vld [vmem:[%s494 + $0x20] sm:$0xff]
        %v625 = vld [vmem:[%s494 + $0x28] sm:$0xff]
        %v626 = vld [vmem:[%s494 + $0x30] sm:$0xff]
        %v627 = vld [vmem:[%s494 + $0x38] sm:$0xff]
        %v628 = vld [vmem:[%s494 + $0x40] sm:$0xff]
        %v629 = vld [vmem:[%s494 + $0x48] sm:$0xff]
        %v630 = vld [vmem:[%s494 + $0x50] sm:$0xff]
        %v631 = vld [vmem:[%s494 + $0x58] sm:$0xff]
        %v632 = vld [vmem:[%s494 + $0x60] sm:$0xff]
        %v633 = vld [vmem:[%s494 + $0x68] sm:$0xff]
        %v634 = vld [vmem:[%s494 + $0x70] sm:$0xff]
        %v635 = vld [vmem:[%s494 + $0x78] sm:$0xff]
        %v636 = vld [vmem:[%s586] sm:$0x3]
        %v638 = vlaneseq
        %v639 = vshrl.u32 %v638, 7
        %v640 = vsub.s32 0, %v639
        %v641 = vrot.slane %v636, %v640
        %v642 = vlaneseq
        %v643 = vshrl.u32 %v642, 7
        %v644 = vsub.s32 1, %v643
        %v645 = vrot.slane %v636, %v644
        %v664 = vunpack.c.l.b16 %v620
        %v665 = vunpack.c.h.b16 %v620
        %v666 = vunpack.c.l.b16 %v621
        %v667 = vunpack.c.h.b16 %v621
        %v668 = vunpack.c.l.b16 %v622
        %v669 = vunpack.c.h.b16 %v622
        %v670 = vunpack.c.l.b16 %v623
        %v671 = vunpack.c.h.b16 %v623
        %v672 = vunpack.c.l.b16 %v624
        %v673 = vunpack.c.h.b16 %v624
        %v674 = vunpack.c.l.b16 %v625
        %v675 = vunpack.c.h.b16 %v625
        %v676 = vunpack.c.l.b16 %v626
        %v677 = vunpack.c.h.b16 %v626
        %v678 = vunpack.c.l.b16 %v627
        %v679 = vunpack.c.h.b16 %v627
        %v680 = vunpack.c.l.b16 %v628
        %v681 = vunpack.c.h.b16 %v628
        %v682 = vunpack.c.l.b16 %v629
        %v683 = vunpack.c.h.b16 %v629
        %v684 = vunpack.c.l.b16 %v630
        %v685 = vunpack.c.h.b16 %v630
        %v686 = vunpack.c.l.b16 %v631
        %v687 = vunpack.c.h.b16 %v631
        %v688 = vunpack.c.l.b16 %v632
        %v689 = vunpack.c.h.b16 %v632
        %v690 = vunpack.c.l.b16 %v633
        %v691 = vunpack.c.h.b16 %v633
        %v692 = vunpack.c.l.b16 %v634
        %v693 = vunpack.c.h.b16 %v634
        %v694 = vunpack.c.l.b16 %v635
        %v695 = vunpack.c.h.b16 %v635
        %v696 = vpack.c.b16 %v666, %v664
        %v697 = vpack.c.b16 %v667, %v665
        %v698 = vpack.c.b16 %v670, %v668
        %v699 = vpack.c.b16 %v671, %v669
        %v700 = vpack.c.b16 %v674, %v672
        %v701 = vpack.c.b16 %v675, %v673
        %v702 = vpack.c.b16 %v678, %v676
        %v703 = vpack.c.b16 %v679, %v677
        %v704 = vpack.c.b16 %v682, %v680
        %v705 = vpack.c.b16 %v683, %v681
        %v706 = vpack.c.b16 %v686, %v684
        %v707 = vpack.c.b16 %v687, %v685
        %v708 = vpack.c.b16 %v690, %v688
        %v709 = vpack.c.b16 %v691, %v689
        %v710 = vpack.c.b16 %v694, %v692
        %v711 = vpack.c.b16 %v695, %v693
        %728 = vmatprep.subr.bf16.mxu0 %v711
        %729 = vmatpush1.bf16.msra.mxu0 %v710
        %730 = vmatprep.subr.bf16.mxu0 %v709
        %731 = vmatpush1.bf16.msra.mxu0 %v708
        %732 = vmatprep.subr.bf16.mxu0 %v707
        %733 = vmatpush1.bf16.msra.mxu0 %v706
        %734 = vmatprep.subr.bf16.mxu0 %v705
        %735 = vmatpush1.bf16.msra.mxu0 %v704
        %736 = vmatprep.subr.bf16.mxu0 %v703
        %737 = vmatpush1.bf16.msra.mxu0 %v702
        %738 = vmatprep.subr.bf16.mxu0 %v701
        %739 = vmatpush1.bf16.msra.mxu0 %v700
        %740 = vmatprep.subr.bf16.mxu0 %v699
        %741 = vmatpush1.bf16.msra.mxu0 %v698
        %742 = vmatprep.subr.bf16.mxu0 %v697
        %743 = vmatpush1.bf16.msra.mxu0 %v696
        %744 = vmatprep.subr.bf16.mxu0 0
        %745 = vmatpush2.bf16.msra.mxu0 0
        %746 = vmatprep.subr.bf16.mxu0 0
        %747 = vmatpush2.bf16.msra.mxu0 0
        %748 = vmatprep.subr.bf16.mxu0 0
        %749 = vmatpush2.bf16.msra.mxu0 0
        %750 = vmatprep.subr.bf16.mxu0 0
        %751 = vmatpush2.bf16.msra.mxu0 0
        %752 = vmatprep.subr.bf16.mxu0 0
        %753 = vmatpush2.bf16.msra.mxu0 0
        %754 = vmatprep.subr.bf16.mxu0 0
        %755 = vmatpush2.bf16.msra.mxu0 0
        %756 = vmatprep.subr.bf16.mxu0 0
        %757 = vmatpush2.bf16.msra.mxu0 0
        %758 = vmatprep.subr.bf16.mxu0 0
        %759 = vmatpush2.bf16.msra.mxu0 0
        %760 = vmatprep.mubr.bf16.mxu0 0
        %761 = vmatmul.mubr.bf16.gmra.mxu0 %v619
        %v762 = vpop.f32.mrf.mxu0
        %v763 = vadd.f32 %v641, %v762
        %v764 = vpop.f32.mrf.mxu0
        %v765 = vadd.f32 %v645, %v764
        %v766 = vpop.f32.mrf.mxu0
        %v767 = vpop.f32.mrf.mxu0
        %768 = vdwg.mxu0
        %v769 = vlaneseq
        %v770 = vshrl.u32 %v769, 7
        %v771 = vlaneseq
        %v772 = vand.u32 %v771, 127
        %vm773 = vcmp.le.s32.totalorder %v772, %v770
        %v774 = vmul.f32 %v765, %v598
        %776 = vrot.lane.b32.xlu0 %v599, 16
        %v777 = vpop.permute.xlu0 %776
        %v779 = vmul.f32 %v765, %v777
        %781 = vrot.lane.b32.xlu0 %v779, 112
        %v782 = vpop.permute.xlu0 %781
        %v784 = vsub.f32 %v774, %v782
        %786 = vrot.lane.b32.xlu0 %v598, 16
        %v787 = vpop.permute.xlu0 %786
        %v789 = vmul.f32 %v765, %v787
        %v790 = vmul.f32 %v765, %v599
        %792 = vrot.lane.b32.xlu0 %v790, 16
        %v793 = vpop.permute.xlu0 %792
        %v795 = vadd.f32 %v789, %v793
        %vm796 = vcmask 130048
        %v797 = vsel %vm796, %v784, %v795
        %v798 = vpack.c.bf16 %v797, %v797
        %v799 = vpack.c.bf16 %v765, %v765
        %800 = vrot.lane.b32.xlu0 %v598, 32
        %v801 = vpop.permute.xlu0 %800
        %v803 = vmul.f32 %v765, %v801
        %804 = vrot.lane.b32.xlu0 %v599, 48
        %v805 = vpop.permute.xlu0 %804
        %v807 = vmul.f32 %v765, %v805
        %809 = vrot.lane.b32.xlu0 %v807, 112
        %v810 = vpop.permute.xlu0 %809
        %v812 = vsub.f32 %v803, %v810
        %813 = vrot.lane.b32.xlu0 %v598, 48
        %v814 = vpop.permute.xlu0 %813
        %v816 = vmul.f32 %v765, %v814
        %817 = vrot.lane.b32.xlu0 %v599, 32
        %v818 = vpop.permute.xlu0 %817
        %v820 = vmul.f32 %v765, %v818
        %822 = vrot.lane.b32.xlu0 %v820, 16
        %v823 = vpop.permute.xlu0 %822
        %v825 = vadd.f32 %v816, %v823
        %827 = vrot.lane.b32.xlu0 %v812, 96
        %v828 = vpop.permute.xlu0 %827
        %831 = vrot.lane.b32.xlu0 %v825, 96
        %v832 = vpop.permute.xlu0 %831
        %v834 = vsel %vm796, %v828, %v832
        %v835 = vpack.c.bf16 %v834, %v834
        %v836 = vmul.f32 %v763, %v598
        %v837 = vmul.f32 %v763, %v777
        %839 = vrot.lane.b32.xlu0 %v837, 112
        %v840 = vpop.permute.xlu0 %839
        %v842 = vsub.f32 %v836, %v840
        %v843 = vmul.f32 %v763, %v787
        %v844 = vmul.f32 %v763, %v599
        %846 = vrot.lane.b32.xlu0 %v844, 16
        %v847 = vpop.permute.xlu0 %846
        %v849 = vadd.f32 %v843, %v847
        %v850 = vsel %vm796, %v842, %v849
        %v851 = vmul.f32 %v850, 0.17677669
        %v852 = vpack.c.bf16 %v851, %v851
        %vm853 = vcmask 261120
        %v855 = vsel %vm853, %v852, 0
        %v858 = vsel %vm853, %v798, 0
        %860 = vmatprep.subr.bf16.mxu0 0
        %861 = vmatpush1.bf16.xpose.msra.mxu0 0
        %862 = vmatprep.subr.bf16.mxu0 0
        %863 = vmatpush1.bf16.xpose.msra.mxu0 0
        %864 = vmatprep.subr.bf16.mxu0 0
        %865 = vmatpush1.bf16.xpose.msra.mxu0 0
        %866 = vmatprep.subr.bf16.mxu0 0
        %867 = vmatpush1.bf16.xpose.msra.mxu0 0
        %868 = vmatprep.subr.bf16.mxu0 0
        %869 = vmatpush1.bf16.xpose.msra.mxu0 0
        %870 = vmatprep.subr.bf16.mxu0 0
        %871 = vmatpush1.bf16.xpose.msra.mxu0 0
        %872 = vmatprep.subr.bf16.mxu0 0
        %873 = vmatpush1.bf16.xpose.msra.mxu0 0
        %874 = vmatprep.subr.bf16.mxu0 0
        %875 = vmatpush1.bf16.xpose.msra.mxu0 %v858
        %876 = vmatprep.subr.bf16.mxu0 0
        %877 = vmatpush2.bf16.xpose.msra.mxu0 0
        %878 = vmatprep.subr.bf16.mxu0 0
        %879 = vmatpush2.bf16.xpose.msra.mxu0 0
        %880 = vmatprep.subr.bf16.mxu0 0
        %881 = vmatpush2.bf16.xpose.msra.mxu0 0
        %882 = vmatprep.subr.bf16.mxu0 0
        %883 = vmatpush2.bf16.xpose.msra.mxu0 0
        %884 = vmatprep.subr.bf16.mxu0 0
        %885 = vmatpush2.bf16.xpose.msra.mxu0 0
        %886 = vmatprep.subr.bf16.mxu0 0
        %887 = vmatpush2.bf16.xpose.msra.mxu0 0
        %888 = vmatprep.subr.bf16.mxu0 0
        %889 = vmatpush2.bf16.xpose.msra.mxu0 0
        %890 = vmatprep.subr.bf16.mxu0 0
        %891 = vmatpush2.bf16.xpose.msra.mxu0 0
        %892 = vmatprep.mubr.bf16.mxu0 0
        %893 = vmatmul.mubr.bf16.gmra.mxu0 %v855
        %v894 = vpop.f32.mrf.mxu0
        %v895 = vadd.f32 0.0, %v894
        %v896 = vpop.f32.mrf.mxu0
        %v897 = vpop.f32.mrf.mxu0
        %v898 = vpop.f32.mrf.mxu0
        %899 = vdwg.mxu0
        %v900 = vsel %vm773, %v895, -1e+30
        %vm901 = vcmask 64512
        %v902 = vsel %vm901, %v900, -inf
        %903 = vmax.xlane.f32.xlu0 %v902
        %v904 = vpop.xlane.xlu0 %903
        %v905 = vsub.f32 %v900, %v904
        %v906 = vmul.f32 %v905, 1.442695
        %v907 = vpow.pop %v906
        %v908 = vsel %vm901, %v907, 0.0
        %909 = vadd.xlane.f32.xlu0 %v908
        %v910 = vpop.xlane.xlu0 %909
        %v911 = vrcp.pop %v910
        %v912 = vpack.c.bf16 %v907, %v907
        %914 = vrot.lane.b32.xlu0 %v799, 64
        %v915 = vpop.permute.xlu0 %914
        %v917 = vsel %vm901, %v912, 0
        %vm919 = vcmask 1043456
        %v921 = vsel %vm919, %v915, 0
        %923 = vmatprep.subr.bf16.mxu0 0
        %924 = vmatpush1.bf16.msra.mxu0 0
        %925 = vmatprep.subr.bf16.mxu0 0
        %926 = vmatpush1.bf16.msra.mxu0 0
        %927 = vmatprep.subr.bf16.mxu0 0
        %928 = vmatpush1.bf16.msra.mxu0 0
        %929 = vmatprep.subr.bf16.mxu0 0
        %930 = vmatpush1.bf16.msra.mxu0 0
        %931 = vmatprep.subr.bf16.mxu0 0
        %932 = vmatpush1.bf16.msra.mxu0 0
        %933 = vmatprep.subr.bf16.mxu0 0
        %934 = vmatpush1.bf16.msra.mxu0 0
        %935 = vmatprep.subr.bf16.mxu0 0
        %936 = vmatpush1.bf16.msra.mxu0 0
        %937 = vmatprep.subr.bf16.mxu0 0
        %938 = vmatpush1.bf16.msra.mxu0 %v921
        %939 = vmatprep.subr.bf16.mxu0 0
        %940 = vmatpush2.bf16.msra.mxu0 0
        %941 = vmatprep.subr.bf16.mxu0 0
        %942 = vmatpush2.bf16.msra.mxu0 0
        %943 = vmatprep.subr.bf16.mxu0 0
        %944 = vmatpush2.bf16.msra.mxu0 0
        %945 = vmatprep.subr.bf16.mxu0 0
        %946 = vmatpush2.bf16.msra.mxu0 0
        %947 = vmatprep.subr.bf16.mxu0 0
        %948 = vmatpush2.bf16.msra.mxu0 0
        %949 = vmatprep.subr.bf16.mxu0 0
        %950 = vmatpush2.bf16.msra.mxu0 0
        %951 = vmatprep.subr.bf16.mxu0 0
        %952 = vmatpush2.bf16.msra.mxu0 0
        %953 = vmatprep.subr.bf16.mxu0 0
        %954 = vmatpush2.bf16.msra.mxu0 0
        %955 = vmatprep.mubr.bf16.mxu0 0
        %956 = vmatmul.mubr.bf16.gmra.mxu0 %v917
        %v957 = vpop.f32.mrf.mxu0
        %v958 = vadd.f32 0.0, %v957
        %v959 = vpop.f32.mrf.mxu0
        %v960 = vpop.f32.mrf.mxu0
        %v961 = vpop.f32.mrf.mxu0
        %962 = vdwg.mxu0
        %v963 = vmul.f32 %v958, %v911
        %v964 = vmul.f32 %v763, %v801
        %v965 = vmul.f32 %v763, %v805
        %967 = vrot.lane.b32.xlu0 %v965, 112
        %v968 = vpop.permute.xlu0 %967
        %v970 = vsub.f32 %v964, %v968
        %v971 = vmul.f32 %v763, %v814
        %v972 = vmul.f32 %v763, %v818
        %974 = vrot.lane.b32.xlu0 %v972, 16
        %v975 = vpop.permute.xlu0 %974
        %v977 = vadd.f32 %v971, %v975
        %979 = vrot.lane.b32.xlu0 %v970, 96
        %v980 = vpop.permute.xlu0 %979
        %983 = vrot.lane.b32.xlu0 %v977, 96
        %v984 = vpop.permute.xlu0 %983
        %v986 = vsel %vm796, %v980, %v984
        %v987 = vmul.f32 %v986, 0.17677669
        %v988 = vpack.c.bf16 %v987, %v987
        %v990 = vsel %vm853, %v988, 0
        %992 = vmatprep.subr.bf16.mxu0 0
        %993 = vmatpush1.bf16.xpose.msra.mxu0 0
        %994 = vmatprep.subr.bf16.mxu0 0
        %995 = vmatpush1.bf16.xpose.msra.mxu0 0
        %996 = vmatprep.subr.bf16.mxu0 0
        %997 = vmatpush1.bf16.xpose.msra.mxu0 0
        %998 = vmatprep.subr.bf16.mxu0 0
        %999 = vmatpush1.bf16.xpose.msra.mxu0 0
        %1000 = vmatprep.subr.bf16.mxu0 0
        %1001 = vmatpush1.bf16.xpose.msra.mxu0 0
        %1002 = vmatprep.subr.bf16.mxu0 0
        %1003 = vmatpush1.bf16.xpose.msra.mxu0 0
        %1004 = vmatprep.subr.bf16.mxu0 0
        %1005 = vmatpush1.bf16.xpose.msra.mxu0 0
        %1006 = vmatprep.subr.bf16.mxu0 0
        %1007 = vmatpush1.bf16.xpose.msra.mxu0 %v858
        %1008 = vmatprep.subr.bf16.mxu0 0
        %1009 = vmatpush2.bf16.xpose.msra.mxu0 0
        %1010 = vmatprep.subr.bf16.mxu0 0
        %1011 = vmatpush2.bf16.xpose.msra.mxu0 0
        %1012 = vmatprep.subr.bf16.mxu0 0
        %1013 = vmatpush2.bf16.xpose.msra.mxu0 0
        %1014 = vmatprep.subr.bf16.mxu0 0
        %1015 = vmatpush2.bf16.xpose.msra.mxu0 0
        %1016 = vmatprep.subr.bf16.mxu0 0
        %1017 = vmatpush2.bf16.xpose.msra.mxu0 0
        %1018 = vmatprep.subr.bf16.mxu0 0
        %1019 = vmatpush2.bf16.xpose.msra.mxu0 0
        %1020 = vmatprep.subr.bf16.mxu0 0
        %1021 = vmatpush2.bf16.xpose.msra.mxu0 0
        %1022 = vmatprep.subr.bf16.mxu0 0
        %1023 = vmatpush2.bf16.xpose.msra.mxu0 0
        %1024 = vmatprep.mubr.bf16.mxu0 0
        %1025 = vmatmul.mubr.bf16.gmra.mxu0 %v990
        %v1026 = vpop.f32.mrf.mxu0
        %v1027 = vadd.f32 0.0, %v1026
        %v1028 = vpop.f32.mrf.mxu0
        %v1029 = vpop.f32.mrf.mxu0
        %v1030 = vpop.f32.mrf.mxu0
        %1031 = vdwg.mxu0
        %v1032 = vsel %vm773, %v1027, -1e+30
        %v1033 = vsel %vm901, %v1032, -inf
        %1034 = vmax.xlane.f32.xlu0 %v1033
        %v1035 = vpop.xlane.xlu0 %1034
        %v1036 = vsub.f32 %v1032, %v1035
        %v1037 = vmul.f32 %v1036, 1.442695
        %v1038 = vpow.pop %v1037
        %v1039 = vsel %vm901, %v1038, 0.0
        %1040 = vadd.xlane.f32.xlu0 %v1039
        %v1041 = vpop.xlane.xlu0 %1040
        %v1042 = vrcp.pop %v1041
        %v1043 = vpack.c.bf16 %v1038, %v1038
        %v1045 = vsel %vm901, %v1043, 0
        %1047 = vmatprep.subr.bf16.mxu0 0
        %1048 = vmatpush1.bf16.msra.mxu0 0
        %1049 = vmatprep.subr.bf16.mxu0 0
        %1050 = vmatpush1.bf16.msra.mxu0 0
        %1051 = vmatprep.subr.bf16.mxu0 0
        %1052 = vmatpush1.bf16.msra.mxu0 0
        %1053 = vmatprep.subr.bf16.mxu0 0
        %1054 = vmatpush1.bf16.msra.mxu0 0
        %1055 = vmatprep.subr.bf16.mxu0 0
        %1056 = vmatpush1.bf16.msra.mxu0 0
        %1057 = vmatprep.subr.bf16.mxu0 0
        %1058 = vmatpush1.bf16.msra.mxu0 0
        %1059 = vmatprep.subr.bf16.mxu0 0
        %1060 = vmatpush1.bf16.msra.mxu0 0
        %1061 = vmatprep.subr.bf16.mxu0 0
        %1062 = vmatpush1.bf16.msra.mxu0 %v921
        %1063 = vmatprep.subr.bf16.mxu0 0
        %1064 = vmatpush2.bf16.msra.mxu0 0
        %1065 = vmatprep.subr.bf16.mxu0 0
        %1066 = vmatpush2.bf16.msra.mxu0 0
        %1067 = vmatprep.subr.bf16.mxu0 0
        %1068 = vmatpush2.bf16.msra.mxu0 0
        %1069 = vmatprep.subr.bf16.mxu0 0
        %1070 = vmatpush2.bf16.msra.mxu0 0
        %1071 = vmatprep.subr.bf16.mxu0 0
        %1072 = vmatpush2.bf16.msra.mxu0 0
        %1073 = vmatprep.subr.bf16.mxu0 0
        %1074 = vmatpush2.bf16.msra.mxu0 0
        %1075 = vmatprep.subr.bf16.mxu0 0
        %1076 = vmatpush2.bf16.msra.mxu0 0
        %1077 = vmatprep.subr.bf16.mxu0 0
        %1078 = vmatpush2.bf16.msra.mxu0 0
        %1079 = vmatprep.mubr.bf16.mxu0 0
        %1080 = vmatmul.mubr.bf16.gmra.mxu0 %v1045
        %v1081 = vpop.f32.mrf.mxu0
        %v1082 = vadd.f32 0.0, %v1081
        %v1083 = vpop.f32.mrf.mxu0
        %v1084 = vpop.f32.mrf.mxu0
        %v1085 = vpop.f32.mrf.mxu0
        %1086 = vdwg.mxu0
        %v1087 = vmul.f32 %v1082, %v1042
        %1088 = vrot.lane.b32.xlu0 %v598, 64
        %v1089 = vpop.permute.xlu0 %1088
        %v1091 = vmul.f32 %v763, %v1089
        %1092 = vrot.lane.b32.xlu0 %v599, 80
        %v1093 = vpop.permute.xlu0 %1092
        %v1095 = vmul.f32 %v763, %v1093
        %1097 = vrot.lane.b32.xlu0 %v1095, 112
        %v1098 = vpop.permute.xlu0 %1097
        %v1100 = vsub.f32 %v1091, %v1098
        %1101 = vrot.lane.b32.xlu0 %v598, 80
        %v1102 = vpop.permute.xlu0 %1101
        %v1104 = vmul.f32 %v763, %v1102
        %1105 = vrot.lane.b32.xlu0 %v599, 64
        %v1106 = vpop.permute.xlu0 %1105
        %v1108 = vmul.f32 %v763, %v1106
        %1110 = vrot.lane.b32.xlu0 %v1108, 16
        %v1111 = vpop.permute.xlu0 %1110
        %v1113 = vadd.f32 %v1104, %v1111
        %1115 = vrot.lane.b32.xlu0 %v1100, 64
        %v1116 = vpop.permute.xlu0 %1115
        %1119 = vrot.lane.b32.xlu0 %v1113, 64
        %v1120 = vpop.permute.xlu0 %1119
        %v1122 = vsel %vm796, %v1116, %v1120
        %v1123 = vmul.f32 %v1122, 0.17677669
        %v1124 = vpack.c.bf16 %v1123, %v1123
        %v1126 = vsel %vm853, %v1124, 0
        %v1129 = vsel %vm853, %v835, 0
        %1131 = vmatprep.subr.bf16.mxu0 0
        %1132 = vmatpush1.bf16.xpose.msra.mxu0 0
        %1133 = vmatprep.subr.bf16.mxu0 0
        %1134 = vmatpush1.bf16.xpose.msra.mxu0 0
        %1135 = vmatprep.subr.bf16.mxu0 0
        %1136 = vmatpush1.bf16.xpose.msra.mxu0 0
        %1137 = vmatprep.subr.bf16.mxu0 0
        %1138 = vmatpush1.bf16.xpose.msra.mxu0 0
        %1139 = vmatprep.subr.bf16.mxu0 0
        %1140 = vmatpush1.bf16.xpose.msra.mxu0 0
        %1141 = vmatprep.subr.bf16.mxu0 0
        %1142 = vmatpush1.bf16.xpose.msra.mxu0 0
        %1143 = vmatprep.subr.bf16.mxu0 0
        %1144 = vmatpush1.bf16.xpose.msra.mxu0 0
        %1145 = vmatprep.subr.bf16.mxu0 0
        %1146 = vmatpush1.bf16.xpose.msra.mxu0 %v1129
        %1147 = vmatprep.subr.bf16.mxu0 0
        %1148 = vmatpush2.bf16.xpose.msra.mxu0 0
        %1149 = vmatprep.subr.bf16.mxu0 0
        %1150 = vmatpush2.bf16.xpose.msra.mxu0 0
        %1151 = vmatprep.subr.bf16.mxu0 0
        %1152 = vmatpush2.bf16.xpose.msra.mxu0 0
        %1153 = vmatprep.subr.bf16.mxu0 0
        %1154 = vmatpush2.bf16.xpose.msra.mxu0 0
        %1155 = vmatprep.subr.bf16.mxu0 0
        %1156 = vmatpush2.bf16.xpose.msra.mxu0 0
        %1157 = vmatprep.subr.bf16.mxu0 0
        %1158 = vmatpush2.bf16.xpose.msra.mxu0 0
        %1159 = vmatprep.subr.bf16.mxu0 0
        %1160 = vmatpush2.bf16.xpose.msra.mxu0 0
        %1161 = vmatprep.subr.bf16.mxu0 0
        %1162 = vmatpush2.bf16.xpose.msra.mxu0 0
        %1163 = vmatprep.mubr.bf16.mxu0 0
        %1164 = vmatmul.mubr.bf16.gmra.mxu0 %v1126
        %v1165 = vpop.f32.mrf.mxu0
        %v1166 = vadd.f32 0.0, %v1165
        %v1167 = vpop.f32.mrf.mxu0
        %v1168 = vpop.f32.mrf.mxu0
        %v1169 = vpop.f32.mrf.mxu0
        %1170 = vdwg.mxu0
        %v1171 = vsel %vm773, %v1166, -1e+30
        %v1172 = vsel %vm901, %v1171, -inf
        %1173 = vmax.xlane.f32.xlu0 %v1172
        %v1174 = vpop.xlane.xlu0 %1173
        %v1175 = vsub.f32 %v1171, %v1174
        %v1176 = vmul.f32 %v1175, 1.442695
        %v1177 = vpow.pop %v1176
        %v1178 = vsel %vm901, %v1177, 0.0
        %1179 = vadd.xlane.f32.xlu0 %v1178
        %v1180 = vpop.xlane.xlu0 %1179
        %v1181 = vrcp.pop %v1180
        %v1182 = vpack.c.bf16 %v1177, %v1177
        %1183 = vrot.lane.b32.xlu0 %v799, 32
        %v1184 = vpop.permute.xlu0 %1183
        %v1186 = vsel %vm901, %v1182, 0
        %v1189 = vsel %vm919, %v1184, 0
        %1191 = vmatprep.subr.bf16.mxu0 0
        %1192 = vmatpush1.bf16.msra.mxu0 0
        %1193 = vmatprep.subr.bf16.mxu0 0
        %1194 = vmatpush1.bf16.msra.mxu0 0
        %1195 = vmatprep.subr.bf16.mxu0 0
        %1196 = vmatpush1.bf16.msra.mxu0 0
        %1197 = vmatprep.subr.bf16.mxu0 0
        %1198 = vmatpush1.bf16.msra.mxu0 0
        %1199 = vmatprep.subr.bf16.mxu0 0
        %1200 = vmatpush1.bf16.msra.mxu0 0
        %1201 = vmatprep.subr.bf16.mxu0 0
        %1202 = vmatpush1.bf16.msra.mxu0 0
        %1203 = vmatprep.subr.bf16.mxu0 0
        %1204 = vmatpush1.bf16.msra.mxu0 0
        %1205 = vmatprep.subr.bf16.mxu0 0
        %1206 = vmatpush1.bf16.msra.mxu0 %v1189
        %1207 = vmatprep.subr.bf16.mxu0 0
        %1208 = vmatpush2.bf16.msra.mxu0 0
        %1209 = vmatprep.subr.bf16.mxu0 0
        %1210 = vmatpush2.bf16.msra.mxu0 0
        %1211 = vmatprep.subr.bf16.mxu0 0
        %1212 = vmatpush2.bf16.msra.mxu0 0
        %1213 = vmatprep.subr.bf16.mxu0 0
        %1214 = vmatpush2.bf16.msra.mxu0 0
        %1215 = vmatprep.subr.bf16.mxu0 0
        %1216 = vmatpush2.bf16.msra.mxu0 0
        %1217 = vmatprep.subr.bf16.mxu0 0
        %1218 = vmatpush2.bf16.msra.mxu0 0
        %1219 = vmatprep.subr.bf16.mxu0 0
        %1220 = vmatpush2.bf16.msra.mxu0 0
        %1221 = vmatprep.subr.bf16.mxu0 0
        %1222 = vmatpush2.bf16.msra.mxu0 0
        %1223 = vmatprep.mubr.bf16.mxu0 0
        %1224 = vmatmul.mubr.bf16.gmra.mxu0 %v1186
        %v1225 = vpop.f32.mrf.mxu0
        %v1226 = vadd.f32 0.0, %v1225
        %v1227 = vpop.f32.mrf.mxu0
        %v1228 = vpop.f32.mrf.mxu0
        %v1229 = vpop.f32.mrf.mxu0
        %1230 = vdwg.mxu0
        %v1231 = vmul.f32 %v1226, %v1181
        %1232 = vrot.lane.b32.xlu0 %v598, 96
        %v1233 = vpop.permute.xlu0 %1232
        %v1235 = vmul.f32 %v763, %v1233
        %1236 = vrot.lane.b32.xlu0 %v599, 112
        %v1237 = vpop.permute.xlu0 %1236
        %v1239 = vmul.f32 %v763, %v1237
        %1241 = vrot.lane.b32.xlu0 %v1239, 112
        %v1242 = vpop.permute.xlu0 %1241
        %v1244 = vsub.f32 %v1235, %v1242
        %1245 = vrot.lane.b32.xlu0 %v598, 112
        %v1246 = vpop.permute.xlu0 %1245
        %v1248 = vmul.f32 %v763, %v1246
        %1249 = vrot.lane.b32.xlu0 %v599, 96
        %v1250 = vpop.permute.xlu0 %1249
        %v1252 = vmul.f32 %v763, %v1250
        %1254 = vrot.lane.b32.xlu0 %v1252, 16
        %v1255 = vpop.permute.xlu0 %1254
        %v1257 = vadd.f32 %v1248, %v1255
        %1259 = vrot.lane.b32.xlu0 %v1244, 32
        %v1260 = vpop.permute.xlu0 %1259
        %1263 = vrot.lane.b32.xlu0 %v1257, 32
        %v1264 = vpop.permute.xlu0 %1263
        %v1266 = vsel %vm796, %v1260, %v1264
        %v1267 = vmul.f32 %v1266, 0.17677669
        %v1268 = vpack.c.bf16 %v1267, %v1267
        %v1270 = vsel %vm853, %v1268, 0
        %1272 = vmatprep.subr.bf16.mxu0 0
        %1273 = vmatpush1.bf16.xpose.msra.mxu0 0
        %1274 = vmatprep.subr.bf16.mxu0 0
        %1275 = vmatpush1.bf16.xpose.msra.mxu0 0
        %1276 = vmatprep.subr.bf16.mxu0 0
        %1277 = vmatpush1.bf16.xpose.msra.mxu0 0
        %1278 = vmatprep.subr.bf16.mxu0 0
        %1279 = vmatpush1.bf16.xpose.msra.mxu0 0
        %1280 = vmatprep.subr.bf16.mxu0 0
        %1281 = vmatpush1.bf16.xpose.msra.mxu0 0
        %1282 = vmatprep.subr.bf16.mxu0 0
        %1283 = vmatpush1.bf16.xpose.msra.mxu0 0
        %1284 = vmatprep.subr.bf16.mxu0 0
        %1285 = vmatpush1.bf16.xpose.msra.mxu0 0
        %1286 = vmatprep.subr.bf16.mxu0 0
        %1287 = vmatpush1.bf16.xpose.msra.mxu0 %v1129
        %1288 = vmatprep.subr.bf16.mxu0 0
        %1289 = vmatpush2.bf16.xpose.msra.mxu0 0
        %1290 = vmatprep.subr.bf16.mxu0 0
        %1291 = vmatpush2.bf16.xpose.msra.mxu0 0
        %1292 = vmatprep.subr.bf16.mxu0 0
        %1293 = vmatpush2.bf16.xpose.msra.mxu0 0
        %1294 = vmatprep.subr.bf16.mxu0 0
        %1295 = vmatpush2.bf16.xpose.msra.mxu0 0
        %1296 = vmatprep.subr.bf16.mxu0 0
        %1297 = vmatpush2.bf16.xpose.msra.mxu0 0
        %1298 = vmatprep.subr.bf16.mxu0 0
        %1299 = vmatpush2.bf16.xpose.msra.mxu0 0
        %1300 = vmatprep.subr.bf16.mxu0 0
        %1301 = vmatpush2.bf16.xpose.msra.mxu0 0
        %1302 = vmatprep.subr.bf16.mxu0 0
        %1303 = vmatpush2.bf16.xpose.msra.mxu0 0
        %1304 = vmatprep.mubr.bf16.mxu0 0
        %1305 = vmatmul.mubr.bf16.gmra.mxu0 %v1270
        %v1306 = vpop.f32.mrf.mxu0
        %v1307 = vadd.f32 0.0, %v1306
        %v1308 = vpop.f32.mrf.mxu0
        %v1309 = vpop.f32.mrf.mxu0
        %v1310 = vpop.f32.mrf.mxu0
        %1311 = vdwg.mxu0
        %v1312 = vsel %vm773, %v1307, -1e+30
        %v1313 = vsel %vm901, %v1312, -inf
        %1314 = vmax.xlane.f32.xlu0 %v1313
        %v1315 = vpop.xlane.xlu0 %1314
        %v1316 = vsub.f32 %v1312, %v1315
        %v1317 = vmul.f32 %v1316, 1.442695
        %v1318 = vpow.pop %v1317
        %v1319 = vsel %vm901, %v1318, 0.0
        %1320 = vadd.xlane.f32.xlu0 %v1319
        %v1321 = vpop.xlane.xlu0 %1320
        %v1322 = vrcp.pop %v1321
        %v1323 = vpack.c.bf16 %v1318, %v1318
        %v1325 = vsel %vm901, %v1323, 0
        %1327 = vmatprep.subr.bf16.mxu0 0
        %1328 = vmatpush1.bf16.msra.mxu0 0
        %1329 = vmatprep.subr.bf16.mxu0 0
        %1330 = vmatpush1.bf16.msra.mxu0 0
        %1331 = vmatprep.subr.bf16.mxu0 0
        %1332 = vmatpush1.bf16.msra.mxu0 0
        %1333 = vmatprep.subr.bf16.mxu0 0
        %1334 = vmatpush1.bf16.msra.mxu0 0
        %1335 = vmatprep.subr.bf16.mxu0 0
        %1336 = vmatpush1.bf16.msra.mxu0 0
        %1337 = vmatprep.subr.bf16.mxu0 0
        %1338 = vmatpush1.bf16.msra.mxu0 0
        %1339 = vmatprep.subr.bf16.mxu0 0
        %1340 = vmatpush1.bf16.msra.mxu0 0
        %1341 = vmatprep.subr.bf16.mxu0 0
        %1342 = vmatpush1.bf16.msra.mxu0 %v1189
        %1343 = vmatprep.subr.bf16.mxu0 0
        %1344 = vmatpush2.bf16.msra.mxu0 0
        %1345 = vmatprep.subr.bf16.mxu0 0
        %1346 = vmatpush2.bf16.msra.mxu0 0
        %1347 = vmatprep.subr.bf16.mxu0 0
        %1348 = vmatpush2.bf16.msra.mxu0 0
        %1349 = vmatprep.subr.bf16.mxu0 0
        %1350 = vmatpush2.bf16.msra.mxu0 0
        %1351 = vmatprep.subr.bf16.mxu0 0
        %1352 = vmatpush2.bf16.msra.mxu0 0
        %1353 = vmatprep.subr.bf16.mxu0 0
        %1354 = vmatpush2.bf16.msra.mxu0 0
        %1355 = vmatprep.subr.bf16.mxu0 0
        %1356 = vmatpush2.bf16.msra.mxu0 0
        %1357 = vmatprep.subr.bf16.mxu0 0
        %1358 = vmatpush2.bf16.msra.mxu0 0
        %1359 = vmatprep.mubr.bf16.mxu0 0
        %1360 = vmatmul.mubr.bf16.gmra.mxu0 %v1325
        %v1361 = vpop.f32.mrf.mxu0
        %v1362 = vadd.f32 0.0, %v1361
        %v1363 = vpop.f32.mrf.mxu0
        %v1364 = vpop.f32.mrf.mxu0
        %v1365 = vpop.f32.mrf.mxu0
        %1366 = vdwg.mxu0
        %v1367 = vmul.f32 %v1362, %v1322
        %1369 = vrot.lane.b32.xlu0 %v1087, 32
        %v1370 = vpop.permute.xlu0 %1369
        %1373 = vrot.lane.b32.xlu0 %v1231, 64
        %v1374 = vpop.permute.xlu0 %1373
        %1377 = vrot.lane.b32.xlu0 %v1367, 96
        %v1378 = vpop.permute.xlu0 %1377
        %v1380 = vsel %vm853, %v963, %v1370
        %vm1381 = vcmask 523264
        %v1382 = vsel %vm1381, %v1380, %v1374
        %vm1383 = vcmask 785408
        %v1384 = vsel %vm1383, %v1382, %v1378
        %v1385 = vpack.c.bf16 %v1384, %v1384
        %v1386 = vld [vmem:[%s503] sm:$0xf]
        %v1387 = vld [vmem:[%s503 + $0x4] sm:$0xf]
        %v1388 = vld [vmem:[%s503 + $0x8] sm:$0xf]
        %v1389 = vld [vmem:[%s503 + $0xc] sm:$0xf]
        %v1390 = vld [vmem:[%s503 + $0x10] sm:$0xf]
        %v1391 = vld [vmem:[%s503 + $0x14] sm:$0xf]
        %v1392 = vld [vmem:[%s503 + $0x18] sm:$0xf]
        %v1393 = vld [vmem:[%s503 + $0x1c] sm:$0xf]
        %v1394 = vld [vmem:[%s503 + $0x20] sm:$0xf]
        %v1395 = vld [vmem:[%s503 + $0x24] sm:$0xf]
        %v1396 = vld [vmem:[%s503 + $0x28] sm:$0xf]
        %v1397 = vld [vmem:[%s503 + $0x2c] sm:$0xf]
        %v1398 = vld [vmem:[%s503 + $0x30] sm:$0xf]
        %v1399 = vld [vmem:[%s503 + $0x34] sm:$0xf]
        %v1400 = vld [vmem:[%s503 + $0x38] sm:$0xf]
        %v1401 = vld [vmem:[%s503 + $0x3c] sm:$0xf]
        %v1418 = vunpack.c.l.b16 %v1386
        %v1419 = vunpack.c.l.b16 %v1387
        %v1420 = vunpack.c.l.b16 %v1388
        %v1421 = vunpack.c.l.b16 %v1389
        %v1422 = vunpack.c.l.b16 %v1390
        %v1423 = vunpack.c.l.b16 %v1391
        %v1424 = vunpack.c.l.b16 %v1392
        %v1425 = vunpack.c.l.b16 %v1393
        %v1426 = vunpack.c.l.b16 %v1394
        %v1427 = vunpack.c.l.b16 %v1395
        %v1428 = vunpack.c.l.b16 %v1396
        %v1429 = vunpack.c.l.b16 %v1397
        %v1430 = vunpack.c.l.b16 %v1398
        %v1431 = vunpack.c.l.b16 %v1399
        %v1432 = vunpack.c.l.b16 %v1400
        %v1433 = vunpack.c.l.b16 %v1401
        %v1434 = vpack.c.b16 %v1419, %v1418
        %v1435 = vpack.c.b16 %v1421, %v1420
        %v1436 = vpack.c.b16 %v1423, %v1422
        %v1437 = vpack.c.b16 %v1425, %v1424
        %v1438 = vpack.c.b16 %v1427, %v1426
        %v1439 = vpack.c.b16 %v1429, %v1428
        %v1440 = vpack.c.b16 %v1431, %v1430
        %v1441 = vpack.c.b16 %v1433, %v1432
        %1450 = vmatprep.subr.bf16.mxu0 0
        %1451 = vmatpush1.bf16.msra.mxu0 %v1441
        %1452 = vmatprep.subr.bf16.mxu0 0
        %1453 = vmatpush1.bf16.msra.mxu0 %v1440
        %1454 = vmatprep.subr.bf16.mxu0 0
        %1455 = vmatpush1.bf16.msra.mxu0 %v1439
        %1456 = vmatprep.subr.bf16.mxu0 0
        %1457 = vmatpush1.bf16.msra.mxu0 %v1438
        %1458 = vmatprep.subr.bf16.mxu0 0
        %1459 = vmatpush1.bf16.msra.mxu0 %v1437
        %1460 = vmatprep.subr.bf16.mxu0 0
        %1461 = vmatpush1.bf16.msra.mxu0 %v1436
        %1462 = vmatprep.subr.bf16.mxu0 0
        %1463 = vmatpush1.bf16.msra.mxu0 %v1435
        %1464 = vmatprep.subr.bf16.mxu0 0
        %1465 = vmatpush1.bf16.msra.mxu0 %v1434
        %1466 = vmatprep.subr.bf16.mxu0 0
        %1467 = vmatpush2.bf16.msra.mxu0 0
        %1468 = vmatprep.subr.bf16.mxu0 0
        %1469 = vmatpush2.bf16.msra.mxu0 0
        %1470 = vmatprep.subr.bf16.mxu0 0
        %1471 = vmatpush2.bf16.msra.mxu0 0
        %1472 = vmatprep.subr.bf16.mxu0 0
        %1473 = vmatpush2.bf16.msra.mxu0 0
        %1474 = vmatprep.subr.bf16.mxu0 0
        %1475 = vmatpush2.bf16.msra.mxu0 0
        %1476 = vmatprep.subr.bf16.mxu0 0
        %1477 = vmatpush2.bf16.msra.mxu0 0
        %1478 = vmatprep.subr.bf16.mxu0 0
        %1479 = vmatpush2.bf16.msra.mxu0 0
        %1480 = vmatprep.subr.bf16.mxu0 0
        %1481 = vmatpush2.bf16.msra.mxu0 0
        %1482 = vmatprep.mubr.bf16.mxu0 0
        %1483 = vmatmul.mubr.bf16.gmra.mxu0 %v1385
        %v1484 = vpop.f32.mrf.mxu0
        %v1485 = vadd.f32 %v602, %v1484
        %v1486 = vpop.f32.mrf.mxu0
        %v1487 = vpop.f32.mrf.mxu0
        %v1488 = vpop.f32.mrf.mxu0
        %1489 = vdwg.mxu0
        %v1490 = vld [vmem:[%s589] sm:$0x1]
        %v1491 = vmul.f32 %v1485, %v1485
        %1492 = vadd.xlane.f32.xlu0 %v1491
        %v1493 = vpop.xlane.xlu0 %1492
        %v1494 = vmul.f32 %v1493, %v607
        %v1495 = vadd.f32 %v1494, 1e-06
        %v1496 = vrsqrt.pop %v1495
        %v1497 = vmul.f32 %v1485, %v1496
        %v1499 = vlaneseq
        %v1500 = vshrl.u32 %v1499, 7
        %v1501 = vsub.s32 0, %v1500
        %v1502 = vrot.slane %v1490, %v1501
        %v1504 = vmul.f32 %v1497, %v1502
        %v1505 = vpack.c.bf16 %v1504, %v1504
        %v1506 = vld [vmem:[%s512] sm:$0xff]
        %v1507 = vld [vmem:[%s512 + $0x8] sm:$0xff]
        %v1508 = vld [vmem:[%s512 + $0x10] sm:$0xff]
        %v1509 = vld [vmem:[%s512 + $0x18] sm:$0xff]
        %v1510 = vld [vmem:[%s512 + $0x20] sm:$0xff]
        %v1511 = vld [vmem:[%s512 + $0x28] sm:$0xff]
        %v1512 = vld [vmem:[%s512 + $0x30] sm:$0xff]
        %v1513 = vld [vmem:[%s512 + $0x38] sm:$0xff]
        %v1514 = vld [vmem:[%s512 + $0x40] sm:$0xff]
        %v1515 = vld [vmem:[%s512 + $0x48] sm:$0xff]
        %v1516 = vld [vmem:[%s512 + $0x50] sm:$0xff]
        %v1517 = vld [vmem:[%s512 + $0x58] sm:$0xff]
        %v1518 = vld [vmem:[%s512 + $0x60] sm:$0xff]
        %v1519 = vld [vmem:[%s512 + $0x68] sm:$0xff]
        %v1520 = vld [vmem:[%s512 + $0x70] sm:$0xff]
        %v1521 = vld [vmem:[%s512 + $0x78] sm:$0xff]
        %v1522 = vld [vmem:[%s512 + $0x80] sm:$0xff]
        %v1523 = vld [vmem:[%s512 + $0x88] sm:$0xff]
        %v1524 = vld [vmem:[%s512 + $0x90] sm:$0xff]
        %v1525 = vld [vmem:[%s512 + $0x98] sm:$0xff]
        %v1526 = vld [vmem:[%s512 + $0xa0] sm:$0xff]
        %v1527 = vld [vmem:[%s512 + $0xa8] sm:$0xff]
        %v1528 = vld [vmem:[%s512 + $0xb0] sm:$0xff]
        %v1529 = vld [vmem:[%s512 + $0xb8] sm:$0xff]
        %v1530 = vld [vmem:[%s512 + $0xc0] sm:$0xff]
        %v1531 = vld [vmem:[%s512 + $0xc8] sm:$0xff]
        %v1532 = vld [vmem:[%s512 + $0xd0] sm:$0xff]
        %v1533 = vld [vmem:[%s512 + $0xd8] sm:$0xff]
        %v1534 = vld [vmem:[%s512 + $0xe0] sm:$0xff]
        %v1535 = vld [vmem:[%s512 + $0xe8] sm:$0xff]
        %v1536 = vld [vmem:[%s512 + $0xf0] sm:$0xff]
        %v1537 = vld [vmem:[%s512 + $0xf8] sm:$0xff]
        %v1570 = vunpack.c.l.b16 %v1506
        %v1571 = vunpack.c.h.b16 %v1506
        %v1572 = vunpack.c.l.b16 %v1507
        %v1573 = vunpack.c.h.b16 %v1507
        %v1574 = vunpack.c.l.b16 %v1508
        %v1575 = vunpack.c.h.b16 %v1508
        %v1576 = vunpack.c.l.b16 %v1509
        %v1577 = vunpack.c.h.b16 %v1509
        %v1578 = vunpack.c.l.b16 %v1510
        %v1579 = vunpack.c.h.b16 %v1510
        %v1580 = vunpack.c.l.b16 %v1511
        %v1581 = vunpack.c.h.b16 %v1511
        %v1582 = vunpack.c.l.b16 %v1512
        %v1583 = vunpack.c.h.b16 %v1512
        %v1584 = vunpack.c.l.b16 %v1513
        %v1585 = vunpack.c.h.b16 %v1513
        %v1586 = vunpack.c.l.b16 %v1514
        %v1587 = vunpack.c.h.b16 %v1514
        %v1588 = vunpack.c.l.b16 %v1515
        %v1589 = vunpack.c.h.b16 %v1515
        %v1590 = vunpack.c.l.b16 %v1516
        %v1591 = vunpack.c.h.b16 %v1516
        %v1592 = vunpack.c.l.b16 %v1517
        %v1593 = vunpack.c.h.b16 %v1517
        %v1594 = vunpack.c.l.b16 %v1518
        %v1595 = vunpack.c.h.b16 %v1518
        %v1596 = vunpack.c.l.b16 %v1519
        %v1597 = vunpack.c.h.b16 %v1519
        %v1598 = vunpack.c.l.b16 %v1520
        %v1599 = vunpack.c.h.b16 %v1520
        %v1600 = vunpack.c.l.b16 %v1521
        %v1601 = vunpack.c.h.b16 %v1521
        %v1602 = vunpack.c.l.b16 %v1522
        %v1603 = vunpack.c.h.b16 %v1522
        %v1604 = vunpack.c.l.b16 %v1523
        %v1605 = vunpack.c.h.b16 %v1523
        %v1606 = vunpack.c.l.b16 %v1524
        %v1607 = vunpack.c.h.b16 %v1524
        %v1608 = vunpack.c.l.b16 %v1525
        %v1609 = vunpack.c.h.b16 %v1525
        %v1610 = vunpack.c.l.b16 %v1526
        %v1611 = vunpack.c.h.b16 %v1526
        %v1612 = vunpack.c.l.b16 %v1527
        %v1613 = vunpack.c.h.b16 %v1527
        %v1614 = vunpack.c.l.b16 %v1528
        %v1615 = vunpack.c.h.b16 %v1528
        %v1616 = vunpack.c.l.b16 %v1529
        %v1617 = vunpack.c.h.b16 %v1529
        %v1618 = vunpack.c.l.b16 %v1530
        %v1619 = vunpack.c.h.b16 %v1530
        %v1620 = vunpack.c.l.b16 %v1531
        %v1621 = vunpack.c.h.b16 %v1531
        %v1622 = vunpack.c.l.b16 %v1532
        %v1623 = vunpack.c.h.b16 %v1532
        %v1624 = vunpack.c.l.b16 %v1533
        %v1625 = vunpack.c.h.b16 %v1533
        %v1626 = vunpack.c.l.b16 %v1534
        %v1627 = vunpack.c.h.b16 %v1534
        %v1628 = vunpack.c.l.b16 %v1535
        %v1629 = vunpack.c.h.b16 %v1535
        %v1630 = vunpack.c.l.b16 %v1536
        %v1631 = vunpack.c.h.b16 %v1536
        %v1632 = vunpack.c.l.b16 %v1537
        %v1633 = vunpack.c.h.b16 %v1537
        %v1634 = vpack.c.b16 %v1574, %v1570
        %v1635 = vpack.c.b16 %v1575, %v1571
        %v1636 = vpack.c.b16 %v1576, %v1572
        %v1637 = vpack.c.b16 %v1577, %v1573
        %v1638 = vpack.c.b16 %v1582, %v1578
        %v1639 = vpack.c.b16 %v1583, %v1579
        %v1640 = vpack.c.b16 %v1584, %v1580
        %v1641 = vpack.c.b16 %v1585, %v1581
        %v1642 = vpack.c.b16 %v1590, %v1586
        %v1643 = vpack.c.b16 %v1591, %v1587
        %v1644 = vpack.c.b16 %v1592, %v1588
        %v1645 = vpack.c.b16 %v1593, %v1589
        %v1646 = vpack.c.b16 %v1598, %v1594
        %v1647 = vpack.c.b16 %v1599, %v1595
        %v1648 = vpack.c.b16 %v1600, %v1596
        %v1649 = vpack.c.b16 %v1601, %v1597
        %v1650 = vpack.c.b16 %v1606, %v1602
        %v1651 = vpack.c.b16 %v1607, %v1603
        %v1652 = vpack.c.b16 %v1608, %v1604
        %v1653 = vpack.c.b16 %v1609, %v1605
        %v1654 = vpack.c.b16 %v1614, %v1610
        %v1655 = vpack.c.b16 %v1615, %v1611
        %v1656 = vpack.c.b16 %v1616, %v1612
        %v1657 = vpack.c.b16 %v1617, %v1613
        %v1658 = vpack.c.b16 %v1622, %v1618
        %v1659 = vpack.c.b16 %v1623, %v1619
        %v1660 = vpack.c.b16 %v1624, %v1620
        %v1661 = vpack.c.b16 %v1625, %v1621
        %v1662 = vpack.c.b16 %v1630, %v1626
        %v1663 = vpack.c.b16 %v1631, %v1627
        %v1664 = vpack.c.b16 %v1632, %v1628
        %v1665 = vpack.c.b16 %v1633, %v1629
        %1698 = vmatprep.subr.bf16.mxu0 %v1663
        %1699 = vmatpush1.bf16.msra.mxu0 %v1662
        %1700 = vmatprep.subr.bf16.mxu0 %v1659
        %1701 = vmatpush1.bf16.msra.mxu0 %v1658
        %1702 = vmatprep.subr.bf16.mxu0 %v1655
        %1703 = vmatpush1.bf16.msra.mxu0 %v1654
        %1704 = vmatprep.subr.bf16.mxu0 %v1651
        %1705 = vmatpush1.bf16.msra.mxu0 %v1650
        %1706 = vmatprep.subr.bf16.mxu0 %v1647
        %1707 = vmatpush1.bf16.msra.mxu0 %v1646
        %1708 = vmatprep.subr.bf16.mxu0 %v1643
        %1709 = vmatpush1.bf16.msra.mxu0 %v1642
        %1710 = vmatprep.subr.bf16.mxu0 %v1639
        %1711 = vmatpush1.bf16.msra.mxu0 %v1638
        %1712 = vmatprep.subr.bf16.mxu0 %v1635
        %1713 = vmatpush1.bf16.msra.mxu0 %v1634
        %1714 = vmatprep.subr.bf16.mxu0 0
        %1715 = vmatpush2.bf16.msra.mxu0 0
        %1716 = vmatprep.subr.bf16.mxu0 0
        %1717 = vmatpush2.bf16.msra.mxu0 0
        %1718 = vmatprep.subr.bf16.mxu0 0
        %1719 = vmatpush2.bf16.msra.mxu0 0
        %1720 = vmatprep.subr.bf16.mxu0 0
        %1721 = vmatpush2.bf16.msra.mxu0 0
        %1722 = vmatprep.subr.bf16.mxu0 0
        %1723 = vmatpush2.bf16.msra.mxu0 0
        %1724 = vmatprep.subr.bf16.mxu0 0
        %1725 = vmatpush2.bf16.msra.mxu0 0
        %1726 = vmatprep.subr.bf16.mxu0 0
        %1727 = vmatpush2.bf16.msra.mxu0 0
        %1728 = vmatprep.subr.bf16.mxu0 0
        %1729 = vmatpush2.bf16.msra.mxu0 0
        %1730 = vmatprep.mubr.bf16.mxu0 0
        %1731 = vmatmul.mubr.bf16.gmra.mxu0 %v1505
        %v1732 = vpop.f32.mrf.mxu0
        %v1733 = vadd.f32 0.0, %v1732
        %v1734 = vpop.f32.mrf.mxu0
        %v1735 = vadd.f32 0.0, %v1734
        %v1736 = vpop.f32.mrf.mxu0
        %v1737 = vpop.f32.mrf.mxu0
        %1738 = vdwg.mxu0
        %1739 = vmatprep.subr.bf16.mxu0 %v1665
        %1740 = vmatpush1.bf16.msra.mxu0 %v1664
        %1741 = vmatprep.subr.bf16.mxu0 %v1661
        %1742 = vmatpush1.bf16.msra.mxu0 %v1660
        %1743 = vmatprep.subr.bf16.mxu0 %v1657
        %1744 = vmatpush1.bf16.msra.mxu0 %v1656
        %1745 = vmatprep.subr.bf16.mxu0 %v1653
        %1746 = vmatpush1.bf16.msra.mxu0 %v1652
        %1747 = vmatprep.subr.bf16.mxu0 %v1649
        %1748 = vmatpush1.bf16.msra.mxu0 %v1648
        %1749 = vmatprep.subr.bf16.mxu0 %v1645
        %1750 = vmatpush1.bf16.msra.mxu0 %v1644
        %1751 = vmatprep.subr.bf16.mxu0 %v1641
        %1752 = vmatpush1.bf16.msra.mxu0 %v1640
        %1753 = vmatprep.subr.bf16.mxu0 %v1637
        %1754 = vmatpush1.bf16.msra.mxu0 %v1636
        %1755 = vmatprep.subr.bf16.mxu0 0
        %1756 = vmatpush2.bf16.msra.mxu0 0
        %1757 = vmatprep.subr.bf16.mxu0 0
        %1758 = vmatpush2.bf16.msra.mxu0 0
        %1759 = vmatprep.subr.bf16.mxu0 0
        %1760 = vmatpush2.bf16.msra.mxu0 0
        %1761 = vmatprep.subr.bf16.mxu0 0
        %1762 = vmatpush2.bf16.msra.mxu0 0
        %1763 = vmatprep.subr.bf16.mxu0 0
        %1764 = vmatpush2.bf16.msra.mxu0 0
        %1765 = vmatprep.subr.bf16.mxu0 0
        %1766 = vmatpush2.bf16.msra.mxu0 0
        %1767 = vmatprep.subr.bf16.mxu0 0
        %1768 = vmatpush2.bf16.msra.mxu0 0
        %1769 = vmatprep.subr.bf16.mxu0 0
        %1770 = vmatpush2.bf16.msra.mxu0 0
        %1771 = vmatprep.mubr.bf16.mxu0 0
        %1772 = vmatmul.mubr.bf16.gmra.mxu0 %v1505
        %v1773 = vpop.f32.mrf.mxu0
        %v1774 = vadd.f32 0.0, %v1773
        %v1775 = vpop.f32.mrf.mxu0
        %v1776 = vadd.f32 0.0, %v1775
        %v1777 = vpop.f32.mrf.mxu0
        %v1778 = vpop.f32.mrf.mxu0
        %1779 = vdwg.mxu0
        %v1780 = vxor.u32 %v1733, 2147483648
        %v1781 = vxor.u32 %v1735, 2147483648
        %v1782 = vmul.f32 %v1780, 1.442695
        %v1783 = vpow.pop %v1782
        %v1784 = vmul.f32 %v1781, 1.442695
        %v1785 = vpow.pop %v1784
        %v1786 = vadd.f32 %v1783, 1.0
        %v1787 = vadd.f32 %v1785, 1.0
        %v1788 = vrcp.pop %v1786
        %v1789 = vmul.f32 1.0, %v1788
        %v1790 = vrcp.pop %v1787
        %v1791 = vmul.f32 1.0, %v1790
        %v1792 = vmul.f32 %v1733, %v1789
        %v1793 = vmul.f32 %v1735, %v1791
        %v1794 = vmul.f32 %v1792, %v1774
        %v1795 = vmul.f32 %v1793, %v1776
        %v1796 = vpack.c.bf16 %v1794, %v1794
        %v1797 = vpack.c.bf16 %v1795, %v1795
        %v1798 = vld [vmem:[%s521] sm:$0xf]
        %v1799 = vld [vmem:[%s521 + $0x4] sm:$0xf]
        %v1800 = vld [vmem:[%s521 + $0x8] sm:$0xf]
        %v1801 = vld [vmem:[%s521 + $0xc] sm:$0xf]
        %v1802 = vld [vmem:[%s521 + $0x10] sm:$0xf]
        %v1803 = vld [vmem:[%s521 + $0x14] sm:$0xf]
        %v1804 = vld [vmem:[%s521 + $0x18] sm:$0xf]
        %v1805 = vld [vmem:[%s521 + $0x1c] sm:$0xf]
        %v1806 = vld [vmem:[%s521 + $0x20] sm:$0xf]
        %v1807 = vld [vmem:[%s521 + $0x24] sm:$0xf]
        %v1808 = vld [vmem:[%s521 + $0x28] sm:$0xf]
        %v1809 = vld [vmem:[%s521 + $0x2c] sm:$0xf]
        %v1810 = vld [vmem:[%s521 + $0x30] sm:$0xf]
        %v1811 = vld [vmem:[%s521 + $0x34] sm:$0xf]
        %v1812 = vld [vmem:[%s521 + $0x38] sm:$0xf]
        %v1813 = vld [vmem:[%s521 + $0x3c] sm:$0xf]
        %v1814 = vld [vmem:[%s521 + $0x40] sm:$0xf]
        %v1815 = vld [vmem:[%s521 + $0x44] sm:$0xf]
        %v1816 = vld [vmem:[%s521 + $0x48] sm:$0xf]
        %v1817 = vld [vmem:[%s521 + $0x4c] sm:$0xf]
        %v1818 = vld [vmem:[%s521 + $0x50] sm:$0xf]
        %v1819 = vld [vmem:[%s521 + $0x54] sm:$0xf]
        %v1820 = vld [vmem:[%s521 + $0x58] sm:$0xf]
        %v1821 = vld [vmem:[%s521 + $0x5c] sm:$0xf]
        %v1822 = vld [vmem:[%s521 + $0x60] sm:$0xf]
        %v1823 = vld [vmem:[%s521 + $0x64] sm:$0xf]
        %v1824 = vld [vmem:[%s521 + $0x68] sm:$0xf]
        %v1825 = vld [vmem:[%s521 + $0x6c] sm:$0xf]
        %v1826 = vld [vmem:[%s521 + $0x70] sm:$0xf]
        %v1827 = vld [vmem:[%s521 + $0x74] sm:$0xf]
        %v1828 = vld [vmem:[%s521 + $0x78] sm:$0xf]
        %v1829 = vld [vmem:[%s521 + $0x7c] sm:$0xf]
        %v1862 = vunpack.c.l.b16 %v1798
        %v1863 = vunpack.c.l.b16 %v1799
        %v1864 = vunpack.c.l.b16 %v1800
        %v1865 = vunpack.c.l.b16 %v1801
        %v1866 = vunpack.c.l.b16 %v1802
        %v1867 = vunpack.c.l.b16 %v1803
        %v1868 = vunpack.c.l.b16 %v1804
        %v1869 = vunpack.c.l.b16 %v1805
        %v1870 = vunpack.c.l.b16 %v1806
        %v1871 = vunpack.c.l.b16 %v1807
        %v1872 = vunpack.c.l.b16 %v1808
        %v1873 = vunpack.c.l.b16 %v1809
        %v1874 = vunpack.c.l.b16 %v1810
        %v1875 = vunpack.c.l.b16 %v1811
        %v1876 = vunpack.c.l.b16 %v1812
        %v1877 = vunpack.c.l.b16 %v1813
        %v1878 = vunpack.c.l.b16 %v1814
        %v1879 = vunpack.c.l.b16 %v1815
        %v1880 = vunpack.c.l.b16 %v1816
        %v1881 = vunpack.c.l.b16 %v1817
        %v1882 = vunpack.c.l.b16 %v1818
        %v1883 = vunpack.c.l.b16 %v1819
        %v1884 = vunpack.c.l.b16 %v1820
        %v1885 = vunpack.c.l.b16 %v1821
        %v1886 = vunpack.c.l.b16 %v1822
        %v1887 = vunpack.c.l.b16 %v1823
        %v1888 = vunpack.c.l.b16 %v1824
        %v1889 = vunpack.c.l.b16 %v1825
        %v1890 = vunpack.c.l.b16 %v1826
        %v1891 = vunpack.c.l.b16 %v1827
        %v1892 = vunpack.c.l.b16 %v1828
        %v1893 = vunpack.c.l.b16 %v1829
        %v1894 = vpack.c.b16 %v1863, %v1862
        %v1895 = vpack.c.b16 %v1865, %v1864
        %v1896 = vpack.c.b16 %v1867, %v1866
        %v1897 = vpack.c.b16 %v1869, %v1868
        %v1898 = vpack.c.b16 %v1871, %v1870
        %v1899 = vpack.c.b16 %v1873, %v1872
        %v1900 = vpack.c.b16 %v1875, %v1874
        %v1901 = vpack.c.b16 %v1877, %v1876
        %v1902 = vpack.c.b16 %v1879, %v1878
        %v1903 = vpack.c.b16 %v1881, %v1880
        %v1904 = vpack.c.b16 %v1883, %v1882
        %v1905 = vpack.c.b16 %v1885, %v1884
        %v1906 = vpack.c.b16 %v1887, %v1886
        %v1907 = vpack.c.b16 %v1889, %v1888
        %v1908 = vpack.c.b16 %v1891, %v1890
        %v1909 = vpack.c.b16 %v1893, %v1892
        %1926 = vmatprep.subr.bf16.mxu0 0
        %1927 = vmatpush1.bf16.msra.mxu0 %v1901
        %1928 = vmatprep.subr.bf16.mxu0 0
        %1929 = vmatpush1.bf16.msra.mxu0 %v1900
        %1930 = vmatprep.subr.bf16.mxu0 0
        %1931 = vmatpush1.bf16.msra.mxu0 %v1899
        %1932 = vmatprep.subr.bf16.mxu0 0
        %1933 = vmatpush1.bf16.msra.mxu0 %v1898
        %1934 = vmatprep.subr.bf16.mxu0 0
        %1935 = vmatpush1.bf16.msra.mxu0 %v1897
        %1936 = vmatprep.subr.bf16.mxu0 0
        %1937 = vmatpush1.bf16.msra.mxu0 %v1896
        %1938 = vmatprep.subr.bf16.mxu0 0
        %1939 = vmatpush1.bf16.msra.mxu0 %v1895
        %1940 = vmatprep.subr.bf16.mxu0 0
        %1941 = vmatpush1.bf16.msra.mxu0 %v1894
        %1942 = vmatprep.subr.bf16.mxu0 0
        %1943 = vmatpush2.bf16.msra.mxu0 %v1909
        %1944 = vmatprep.subr.bf16.mxu0 0
        %1945 = vmatpush2.bf16.msra.mxu0 %v1908
        %1946 = vmatprep.subr.bf16.mxu0 0
        %1947 = vmatpush2.bf16.msra.mxu0 %v1907
        %1948 = vmatprep.subr.bf16.mxu0 0
        %1949 = vmatpush2.bf16.msra.mxu0 %v1906
        %1950 = vmatprep.subr.bf16.mxu0 0
        %1951 = vmatpush2.bf16.msra.mxu0 %v1905
        %1952 = vmatprep.subr.bf16.mxu0 0
        %1953 = vmatpush2.bf16.msra.mxu0 %v1904
        %1954 = vmatprep.subr.bf16.mxu0 0
        %1955 = vmatpush2.bf16.msra.mxu0 %v1903
        %1956 = vmatprep.subr.bf16.mxu0 0
        %1957 = vmatpush2.bf16.msra.mxu0 %v1902
        %1958 = vmatprep.mubr.bf16.mxu0 %v1797
        %1959 = vmatmul.mubr.bf16.gmra.mxu0 %v1796
        %v1960 = vpop.f32.mrf.mxu0
        %v1961 = vadd.f32 0.0, %v1960
        %v1962 = vpop.f32.mrf.mxu0
        %v1963 = vpop.f32.mrf.mxu0
        %v1964 = vpop.f32.mrf.mxu0
        %1965 = vdwg.mxu0
        %1966 = vst [vmem:[#allocation2] sm:$0xff] %v1961
        %1967 = vst [vmem:[#allocation3] sm:$0xff] %v1485
        %p1968 = scmp.eq.s32.totalorder %s31, 1
        // Predicated region
        $region97: #{tpu_custom_call.1} parent=63 // pred_check
          %p1969 = pneg %p1968
        $region98: #{tpu_custom_call.1} parent=63 // pred_check_branch
          %1971 = sbr.rel (%p1969) target = $region100
        $region99: #{tpu_custom_call.1} parent=63 // pred_region
          %v1972 = vadd.f32 %v1961, %v1485
          %v1973 = vmul.f32 %v1972, %v1972
          %1974 = vadd.xlane.f32.xlu0 %v1973
          %v1975 = vpop.xlane.xlu0 %1974
          %v1976 = vmul.f32 %v1975, %v607
          %v1977 = vadd.f32 %v1976, 1e-06
          %v1978 = vrsqrt.pop %v1977
          %v1979 = vmul.f32 %v1972, %v1978
          %v1980 = vld [vmem:[%s10] sm:$0x1]
          %v1982 = vlaneseq
          %v1983 = vshrl.u32 %v1982, 7
          %v1984 = vsub.s32 0, %v1983
          %v1985 = vrot.slane %v1980, %v1984
          %v1987 = vmul.f32 %v1979, %v1985
          %1988 = vst [vmem:[#allocation16] sm:$0xff] %v1987
        $region100: #{tpu_custom_call.1} parent=63 // pred_fallthru
          _
        // Predicated region
        $region101: #{tpu_custom_call.1} parent=63 // pred_check
          %p1989 = pneg %p310
        $region102: #{tpu_custom_call.1} parent=63 // pred_check_branch
          %1991 = sbr.rel (%p1989) target = $region104
        $region103: #{tpu_custom_call.1} parent=63 // pred_region
          %s1993 = ssub.s32 128, 128
          %1994 = vsyncadd [#allocation6], %s1993
          %s1996 = sshll.u32 [#allocation16], 4
          %s1997 = int_to_ptr.vmem [resolvable:$true] %s1996
          %1999 = dma.vmem_to_hbm [thread:$0]  %s1997, 128, %s11, [#allocation6]
        $region104: #{tpu_custom_call.1} parent=63 // pred_fallthru
          _
        // Predicated region
        $region105: #{tpu_custom_call.1} parent=63 // pred_check
          %p2000 = pneg %p310
        $region106: #{tpu_custom_call.1} parent=63 // pred_check_branch
          %2002 = sbr.rel (%p2000) target = $region108
        $region107: #{tpu_custom_call.1} parent=63 // pred_region
          %2003 = dma.done [#allocation6], 128
        $region108: #{tpu_custom_call.1} parent=63 // pred_fallthru
          _
      $region64: #{tpu_custom_call.1} parent=5 // pred_fallthru
        _
      %p2004 = scmp.le.s32.totalorder 2, %s26
      // Predicated region
      $region109: #{tpu_custom_call.1} parent=5 // pred_check
        %p2005 = pneg %p2004
      $region110: #{tpu_custom_call.1} parent=5 // pred_check_branch
        %2007 = sbr.rel (%p2005) target = $region112
      $region111: #{tpu_custom_call.1} parent=5 // pred_region
        %s2008 = ssub.s32 %s26, 2
      $region112: #{tpu_custom_call.1} parent=5 // pred_fallthru
        _
    $region6: #{tpu_custom_call.1} parent=1 // loop_footer
      %s30 = sadd.s32 1, %s26
    $region7: #{tpu_custom_call.1} parent=1 // loop_footer_branch
      %25 = sbr.rel target = $region3
    $region8: #{tpu_custom_call.1} parent=1 // loop_exit
      _
    %2009 = vsyncpa [#allocation5], 1
    %s2010 = scalar_lea.sflag [#allocation5], 1
    %2011 = vsyncpa %s2010, 1
    %2012 = vsyncpa [#allocation8], 1
    %2013 = vsyncpa [#allocation11], 1
    %s2014 = scalar_lea.sflag [#allocation11], 1
    %2015 = vsyncpa %s2014, 1
    %2016 = vsyncpa [#allocation14], 1
    %s2017 = scalar_lea.sflag [#allocation14], 1
    %2018 = vsyncpa %s2017, 1
    %2019 = vsyncpa [#allocation6], 1
    %s2020 = scalar_lea.sflag [#allocation6], 1
    %2021 = vsyncpa %s2020, 1

</llo_original>
